<compile_context>
chip_gen: v7x
topology: tpu7x:2x2x1
jax: 0.10.0
libtpu: 0.0.40
codegen_flags: <defaults>
</compile_context>

<pallas_src>
import jax
import jax.numpy as jnp
from jax.experimental import pallas as pl
from jax.experimental.pallas import tpu as pltpu

PAD_ID = 1
SEP_ID = 2


# ----------------------------------------------------------------------------
# per-generation knobs
# ----------------------------------------------------------------------------
def _vmem_limit_bytes():
    try:
        cap = int(pltpu.get_tpu_info().vmem_capacity_bytes)
    except Exception:
        cap = 64 * 1024 * 1024  # conservative (v7x) fallback
    return min(cap - 16 * 1024 * 1024, 112 * 1024 * 1024)


_VMEM_LIMIT = _vmem_limit_bytes()
_MAX_ROW_TILE = 512 if _VMEM_LIMIT <= 48 * 1024 * 1024 else 1024


def _compiler_params(semantics):
    return pltpu.CompilerParams(
        dimension_semantics=semantics, vmem_limit_bytes=_VMEM_LIMIT
    )


# ----------------------------------------------------------------------------
# tiling / padding helpers
# ----------------------------------------------------------------------------
def _ceil_to(x, m):
    return ((x + m - 1) // m) * m


def _tile_rows(rows):
    """(padded_rows, tile).  Rows padded to a multiple of 16 (bf16 sublane pack)."""
    rp = _ceil_to(rows, 16)
    if rp <= _MAX_ROW_TILE:
        return rp, rp
    rp = _ceil_to(rows, _MAX_ROW_TILE)
    return rp, _MAX_ROW_TILE


def _pad_rows(a, rows_pad, fill=0):
    pad = rows_pad - a.shape[0]
    if pad == 0:
        return a
    cfg = [(0, pad)] + [(0, 0)] * (a.ndim - 1)
    return jnp.pad(a, cfg, constant_values=fill)


def _full_spec(shape):
    n = len(shape)
    return pl.BlockSpec(shape, lambda *_, n=n: (0,) * n)


# ----------------------------------------------------------------------------
# in-kernel MLP helpers (split-K concat fusion, bf16 MXU, f32 accumulation)
# ----------------------------------------------------------------------------
def _ln_relu(h, g, be):
    mu = jnp.mean(h, axis=-1, keepdims=True)
    var = jnp.mean((h - mu) ** 2, axis=-1, keepdims=True)
    hn = (h - mu) * jax.lax.rsqrt(var + 1e-5)
    return jnp.maximum(hn * g + be, 0.0)


def _run_mlp_hidden(ins, prefs, start, n_hidden):
    """Hidden stack (Linear->LN->ReLU) x n_hidden.  Returns (h_f32, next_param_idx)."""
    n_inputs = len(ins)
    idx = start
    acc = None
    for k in range(n_inputs):
        d = jnp.dot(
            ins[k].astype(jnp.bfloat16),
            prefs[idx + k][...],
            preferred_element_type=jnp.float32,
        )
        acc = d if acc is None else acc + d
    idx += n_inputs
    h = _ln_relu(acc + prefs[idx][...], prefs[idx + 1][...], prefs[idx + 2][...])
    idx += 3
    for _ in range(n_hidden - 1):
        w, b, g, be = (
            prefs[idx][...],
            prefs[idx + 1][...],
            prefs[idx + 2][...],
            prefs[idx + 3][...],
        )
        idx += 4
        h = _ln_relu(
            jnp.dot(h.astype(jnp.bfloat16), w, preferred_element_type=jnp.float32) + b,
            g,
            be,
        )
    return h, idx


def _run_mlp(ins, prefs, start, n_hidden):
    h, idx = _run_mlp_hidden(ins, prefs, start, n_hidden)
    out = (
        jnp.dot(
            h.astype(jnp.bfloat16), prefs[idx][...], preferred_element_type=jnp.float32
        )
        + prefs[idx + 1][...]
    )
    return out, idx + 2


def _mlp_hidden_params(mlp):
    flat = list(mlp["w0s"]) + [mlp["b0"], mlp["g0"], mlp["be0"]]
    for lyr in mlp["hidden"]:
        flat += [lyr["w"], lyr["b"], lyr["g"], lyr["be"]]
    return flat


def _mlp_flat_params(mlp):
    return _mlp_hidden_params(mlp) + [mlp["wf"], mlp["bf"]]


# ----------------------------------------------------------------------------
# kernels
# ----------------------------------------------------------------------------
def _make_masked_mean_kernel(seq_len, vocab):
    inv_len = 1.0 / float(seq_len)

    def kernel(tok_ref, emb_ref, out_ref):
        tok = tok_ref[...]  # (tile, L, 1) int32
        tile = tok.shape[0]
        # 1 - ((x==pad) + (x==sep)) exactly as in the torch module
        mask = 1.0 - (
            (tok == PAD_ID).astype(jnp.float32) + (tok == SEP_ID).astype(jnp.float32)
        )  # (tile, L, 1)
        iota_v = jax.lax.broadcasted_iota(jnp.int32, (tile, seq_len, vocab), 2)
        oh = (iota_v == tok).astype(jnp.float32)  # (tile, L, V)
        hist = jnp.sum(oh * mask, axis=1)  # (tile, V) masked token histogram
        # embedding gather folded into one MXU matmul against the resident table
        pooled = (
            jnp.dot(
                hist.astype(jnp.bfloat16),
                emb_ref[...],
                preferred_element_type=jnp.float32,
            )
            * inv_len  # matches torch .mean(1): divide by L, not the valid count
        )
        out_ref[...] = pooled.astype(out_ref.dtype)

    return kernel


def _make_edge_fused_kernel(n_hidden_edge, n_hidden_wt):
    # edge_mlp (split-K over [x_row, x_col, edge_attr, u_edge]) fused with
    # weight_mlp (split-K over [edge_attr, u_edge]); weight head = VPU mul + lane reduce.
    def kernel(*refs):
        ea_out, wt_out = refs[-2], refs[-1]
        x_row, x_col, e_attr, u_e = (refs[k][...] for k in range(4))
        prefs = refs[4:-2]
        out_e, idx = _run_mlp([x_row, x_col, e_attr, u_e], prefs, 0, n_hidden_edge)
        ea_out[...] = out_e.astype(ea_out.dtype)
        hw, idx = _run_mlp_hidden([e_attr, u_e], prefs, idx, n_hidden_wt)
        wf_t = prefs[idx][...].astype(jnp.float32)  # (1, hidden)
        bf = prefs[idx + 1][...]  # (1, 1)
        wt_out[...] = jnp.sum(hw * wf_t, axis=-1, keepdims=True) + bf

    return kernel


def _make_softmax_kernel(num_graphs):
    # scatter_softmax(logits, edge_batch): tiny kernel, reads/writes only (E,1).
    def kernel(logit_ref, eb_ref, out_ref):
        wts = logit_ref[...]  # (E, 1) f32
        eb = eb_ref[...]  # (E, 1) int32 (-1 for padded edges)
        E = wts.shape[0]
        oh = (
            jax.lax.broadcasted_iota(jnp.int32, (E, num_graphs), 1) == eb
        ).astype(jnp.float32)  # (E, B)
        masked = jnp.where(oh > 0.5, wts, jnp.float32(-1e30))
        seg_max = jnp.max(masked, axis=0, keepdims=True)  # (1, B)
        e_max = jnp.sum(oh * seg_max, axis=1, keepdims=True)  # (E, 1)
        ex = jnp.exp(wts - e_max)
        seg_sum = jnp.sum(oh * ex, axis=0, keepdims=True)  # (1, B)
        e_sum = jnp.sum(oh * seg_sum, axis=1, keepdims=True)  # (E, 1)
        inv = jnp.where(e_sum > 0.0, pl.reciprocal(e_sum, approx=True), 0.0)
        out_ref[...] = ex * inv  # padded edges -> 0

    return kernel


def _make_node_fused_kernel(n_hidden_msg, n_hidden_node):
    # message_mlp + weighted scatter_mean over col + node_mlp, fully fused.
    # Grid: (node tiles "parallel", edge tiles "arbitrary"); `received` stays in VMEM.
    def kernel(*refs):
        out_ref = refs[-3]
        acc_ref, cnt_ref = refs[-2], refs[-1]
        prefs = refs[6:-3]
        n = pl.program_id(0)
        e = pl.program_id(1)

        @pl.when(e == 0)
        def _():
            acc_ref[...] = jnp.zeros_like(acc_ref)
            cnt_ref[...] = jnp.zeros_like(cnt_ref)

        x_row = refs[0][...]  # (tileE, 768) bf16
        nea = refs[1][...]  # (tileE, 384) bf16
        wts = refs[2][...]  # (tileE, 1)   f32
        col = refs[3][...]  # (1, tileE)   int32 (-1 for padded edges)

        msg, idx = _run_mlp([x_row, nea], prefs, 0, n_hidden_msg)  # (tileE, 256) f32
        weighted = (msg * wts).astype(jnp.bfloat16)

        tile_n = out_ref.shape[0]
        tile_e = x_row.shape[0]
        node_ids = (
            jax.lax.broadcasted_iota(jnp.int32, (tile_n, tile_e), 0) + n * tile_n
        )
        oh = (node_ids == col).astype(jnp.float32)  # (tileN, tileE)
        dn = (((1,), (0,)), ((), ()))
        acc_ref[...] += jax.lax.dot_general(
            oh.astype(jnp.bfloat16), weighted, dn, preferred_element_type=jnp.float32
        )
        cnt_ref[...] += jnp.sum(oh, axis=1, keepdims=True)

        @pl.when(e == pl.num_programs(1) - 1)
        def _():
            x = refs[4][...]  # (tileN, 768) bf16
            u_n = refs[5][...]  # (tileN, u)   bf16
            received = acc_ref[...] * pl.reciprocal(
                jnp.maximum(cnt_ref[...], 1.0), approx=True
            )
            out, _ = _run_mlp([x, received, u_n], prefs, idx, n_hidden_node)
            out_ref[...] = out.astype(out_ref.dtype)

    return kernel


def _make_segment_mean_kernel(num_segments, weighted):
    # scatter_mean(vals [* w], seg, dim_size=num_segments) with a reduction grid.
    def kernel(*refs):
        out_ref = refs[-3]
        acc_ref, cnt_ref = refs[-2], refs[-1]
        vals = refs[0][...]
        if weighted:
            vals = vals.astype(jnp.float32) * refs[1][...]
            seg = refs[2][...]  # (1, tile) int32
        else:
            seg = refs[1][...]
        r = pl.program_id(0)

        @pl.when(r == 0)
        def _():
            acc_ref[...] = jnp.zeros_like(acc_ref)
            cnt_ref[...] = jnp.zeros_like(cnt_ref)

        tile = vals.shape[0]
        seg_ids = jax.lax.broadcasted_iota(jnp.int32, (num_segments, tile), 0)
        oh = (seg_ids == seg).astype(jnp.float32)  # (B, tile)
        dn = (((1,), (0,)), ((), ()))
        acc_ref[...] += jax.lax.dot_general(
            oh.astype(jnp.bfloat16),
            vals.astype(jnp.bfloat16),
            dn,
            preferred_element_type=jnp.float32,
        )
        cnt_ref[...] += jnp.sum(oh, axis=1, keepdims=True)

        @pl.when(r == pl.num_programs(0) - 1)
        def _():
            out_ref[...] = acc_ref[...] * pl.reciprocal(
                jnp.maximum(cnt_ref[...], 1.0), approx=True
            )

    return kernel


# ----------------------------------------------------------------------------
# pallas_call wrappers
# ----------------------------------------------------------------------------
def masked_mean(tokens, emb_table):
    R, L = tokens.shape
    V, D = emb_table.shape
    R_pad, tile = _tile_rows(R)
    tok3 = _pad_rows(tokens.astype(jnp.int32), R_pad)[:, :, None]  # (R_pad, L, 1)
    grid = (R_pad // tile,)
    out = pl.pallas_call(
        _make_masked_mean_kernel(L, V),
        grid=grid,
        in_specs=[
            pl.BlockSpec((tile, L, 1), lambda i: (i, 0, 0)),
            pl.BlockSpec((V, D), lambda i: (0, 0)),  # resident embedding table
        ],
        out_specs=pl.BlockSpec((tile, D), lambda i: (i, 0)),
        out_shape=jax.ShapeDtypeStruct((R_pad, D), jnp.bfloat16),
        compiler_params=_compiler_params(("parallel",)),
    )(tok3, emb_table)
    return out[:R]


def edge_fused(x_row_p, x_col_p, edge_attr_p, u_edge_p, edge_mlp, weight_mlp):
    E_pad = x_row_p.shape[0]
    _, tile = _tile_rows(E_pad)
    ins = [x_row_p, x_col_p, edge_attr_p, u_edge_p]
    eflat = _mlp_flat_params(edge_mlp)
    wflat = _mlp_hidden_params(weight_mlp) + [weight_mlp["wf"].T, weight_mlp["bf"]]
    n_h_e = 1 + len(edge_mlp["hidden"])
    n_h_w = 1 + len(weight_mlp["hidden"])
    out_dim = edge_mlp["wf"].shape[1]
    grid = (E_pad // tile,)
    in_specs = [pl.BlockSpec((tile, a.shape[1]), lambda i: (i, 0)) for a in ins]
    in_specs += [_full_spec(p.shape) for p in eflat + wflat]
    return pl.pallas_call(
        _make_edge_fused_kernel(n_h_e, n_h_w),
        grid=grid,
        in_specs=in_specs,
        out_specs=(
            pl.BlockSpec((tile, out_dim), lambda i: (i, 0)),
            pl.BlockSpec((tile, 1), lambda i: (i, 0)),
        ),
        out_shape=(
            jax.ShapeDtypeStruct((E_pad, out_dim), jnp.bfloat16),
            jax.ShapeDtypeStruct((E_pad, 1), jnp.float32),
        ),
        compiler_params=_compiler_params(("parallel",)),
    )(*ins, *eflat, *wflat)


def weight_softmax(logits_p, edge_batch_col_p, num_graphs):
    E_pad = logits_p.shape[0]
    return pl.pallas_call(
        _make_softmax_kernel(num_graphs),
        grid=(1,),
        in_specs=[_full_spec((E_pad, 1)), _full_spec((E_pad, 1))],
        out_specs=_full_spec((E_pad, 1)),
        out_shape=jax.ShapeDtypeStruct((E_pad, 1), jnp.float32),
        compiler_params=_compiler_params(("arbitrary",)),
    )(logits_p, edge_batch_col_p)


def node_fused(x_row_p, nea_p, wts_p, col_row_p, x_p, u_node_p, message_mlp, node_mlp):
    E_pad = x_row_p.shape[0]
    N_pad = x_p.shape[0]
    _, tile_e = _tile_rows(E_pad)
    _, tile_n = _tile_rows(N_pad)
    msg_flat = _mlp_flat_params(message_mlp)
    node_flat = _mlp_flat_params(node_mlp)
    n_h_m = 1 + len(message_mlp["hidden"])
    n_h_n = 1 + len(node_mlp["hidden"])
    msg_dim = message_mlp["wf"].shape[1]
    out_dim = node_mlp["wf"].shape[1]
    grid = (N_pad // tile_n, E_pad // tile_e)
    in_specs = [
        pl.BlockSpec((tile_e, x_row_p.shape[1]), lambda n, e: (e, 0)),
        pl.BlockSpec((tile_e, nea_p.shape[1]), lambda n, e: (e, 0)),
        pl.BlockSpec((tile_e, 1), lambda n, e: (e, 0)),
        pl.BlockSpec((1, tile_e), lambda n, e: (0, e)),
        pl.BlockSpec((tile_n, x_p.shape[1]), lambda n, e: (n, 0)),
        pl.BlockSpec((tile_n, u_node_p.shape[1]), lambda n, e: (n, 0)),
    ] + [_full_spec(p.shape) for p in msg_flat + node_flat]
    return pl.pallas_call(
        _make_node_fused_kernel(n_h_m, n_h_n),
        grid=grid,
        in_specs=in_specs,
        out_specs=pl.BlockSpec((tile_n, out_dim), lambda n, e: (n, 0)),
        out_shape=jax.ShapeDtypeStruct((N_pad, out_dim), jnp.bfloat16),
        scratch_shapes=[
            pltpu.VMEM((tile_n, msg_dim), jnp.float32),
            pltpu.VMEM((tile_n, 1), jnp.float32),
        ],
        compiler_params=_compiler_params(("parallel", "arbitrary")),
    )(x_row_p, nea_p, wts_p, col_row_p, x_p, u_node_p, *msg_flat, *node_flat)


def segment_mean(vals_p, seg_row_p, num_segments, weights_p=None):
    R_pad, D = vals_p.shape
    _, tile = _tile_rows(R_pad)
    grid = (R_pad // tile,)
    args = [vals_p]
    in_specs = [pl.BlockSpec((tile, D), lambda r: (r, 0))]
    if weights_p is not None:
        args.append(weights_p)
        in_specs.append(pl.BlockSpec((tile, 1), lambda r: (r, 0)))
    args.append(seg_row_p)
    in_specs.append(pl.BlockSpec((1, tile), lambda r: (0, r)))
    return pl.pallas_call(
        _make_segment_mean_kernel(num_segments, weights_p is not None),
        grid=grid,
        in_specs=in_specs,
        out_specs=pl.BlockSpec((num_segments, D), lambda r: (0, 0)),
        out_shape=jax.ShapeDtypeStruct((num_segments, D), jnp.float32),
        scratch_shapes=[
            pltpu.VMEM((num_segments, D), jnp.float32),
            pltpu.VMEM((num_segments, 1), jnp.float32),
        ],
        compiler_params=_compiler_params(("arbitrary",)),
    )(*args)


# ----------------------------------------------------------------------------
# parameter init (deterministic, synthetic; matmul weights stored in bf16)
# ----------------------------------------------------------------------------
def init_mlp(key, in_dims, hidden, out_dim, n_hidden):
    ks = iter(jax.random.split(key, len(in_dims) + n_hidden))
    mlp = {
        "w0s": [
            (jax.random.normal(next(ks), (d, hidden), jnp.float32) * 0.02).astype(
                jnp.bfloat16
            )
            for d in in_dims
        ],
        "b0": jnp.zeros((1, hidden), jnp.float32),
        "g0": jnp.ones((1, hidden), jnp.float32),
        "be0": jnp.zeros((1, hidden), jnp.float32),
        "hidden": [],
    }
    for _ in range(n_hidden - 1):
        mlp["hidden"].append(
            dict(
                w=(
                    jax.random.normal(next(ks), (hidden, hidden), jnp.float32) * 0.02
                ).astype(jnp.bfloat16),
                b=jnp.zeros((1, hidden), jnp.float32),
                g=jnp.ones((1, hidden), jnp.float32),
                be=jnp.zeros((1, hidden), jnp.float32),
            )
        )
    mlp["wf"] = (
        jax.random.normal(next(ks), (hidden, out_dim), jnp.float32) * 0.02
    ).astype(jnp.bfloat16)
    mlp["bf"] = jnp.zeros((1, out_dim), jnp.float32)
    return mlp


def init_params(key, vocab, emb_dim, u_dim):
    keys = jax.random.split(key, 5)
    return {
        "emb": (
            jax.random.normal(keys[0], (vocab, emb_dim), jnp.float32) * 0.02
        ).astype(jnp.bfloat16),
        # EdgeModel: split-K first layers match [x_row, x_col, edge_attr, u_edge] / [edge_attr, u_edge]
        "edge_mlp": init_mlp(keys[1], (emb_dim, emb_dim, emb_dim, u_dim), 128, 768 // 2, 2),
        "weight_mlp": init_mlp(keys[2], (emb_dim, u_dim), 128, 1, 1),
        # NodeModel: [x_row, new_edge_attr] / [x, received, u_node]
        "message_mlp": init_mlp(keys[3], (emb_dim, 768 // 2), 128, 256, 2),
        "node_mlp": init_mlp(keys[4], (emb_dim, 256, u_dim), 128, 768 // 2, 2),
    }


# ----------------------------------------------------------------------------
# forward pass (GraphNetwork.forward, ablation=['edge_weight', 'use_vec'])
# ----------------------------------------------------------------------------
def graph_network_forward(params, x_tokens, edge_index, edge_tokens, u, node_batch):
    emb = params["emb"]  # (V, D) bf16, resident in the masked-mean kernel
    N = x_tokens.shape[0]
    E = edge_tokens.shape[0]
    B = u.shape[0]

    # ---- token -> node / edge features (mask + gather + mean fused on the MXU)
    x = masked_mean(x_tokens[:, 1:], emb)          # (N, 768) bf16
    edge_attr = masked_mean(edge_tokens[:, 1:], emb)  # (E, 768) bf16

    row, col = edge_index[0], edge_index[1]
    edge_batch = jnp.take(node_batch, row, axis=0).astype(jnp.int32)  # (E,)
    u_bf = u.astype(jnp.bfloat16)
    u_edge = jnp.take(u_bf, edge_batch, axis=0)  # (E, u) bf16
    u_node = jnp.take(u_bf, node_batch, axis=0)  # (N, u) bf16
    x_row = jnp.take(x, row, axis=0)  # (E, 768) bf16
    x_col = jnp.take(x, col, axis=0)  # (E, 768) bf16

    # ---- padding to row-tile multiples (padded rows get segment/col id -1)
    E_pad, _ = _tile_rows(E)
    N_pad, _ = _tile_rows(N)
    x_row_p = _pad_rows(x_row, E_pad)
    x_col_p = _pad_rows(x_col, E_pad)
    edge_attr_p = _pad_rows(edge_attr, E_pad)
    u_edge_p = _pad_rows(u_edge, E_pad)
    x_p = _pad_rows(x, N_pad)
    u_node_p = _pad_rows(u_node, N_pad)
    eb_pad = jnp.pad(edge_batch, (0, E_pad - E), constant_values=-1)
    col_pad = jnp.pad(col.astype(jnp.int32), (0, E_pad - E), constant_values=-1)
    nb_pad = jnp.pad(node_batch.astype(jnp.int32), (0, N_pad - N), constant_values=-1)

    # ---- EdgeModel: edge_mlp + weight_mlp fused (split-K concat folding)
    new_edge_attr_p, logits_p = edge_fused(
        x_row_p, x_col_p, edge_attr_p, u_edge_p,
        params["edge_mlp"], params["weight_mlp"],
    )  # (E_pad, 384) bf16, (E_pad, 1) f32

    # ---- scatter_softmax(weights, edge_batch)
    normalized_wts_p = weight_softmax(logits_p, eb_pad[:, None], B)  # (E_pad, 1) f32

    # ---- NodeModel: message_mlp + weighted scatter_mean(col) + node_mlp fused
    new_x_p = node_fused(
        x_row_p, new_edge_attr_p, normalized_wts_p, col_pad[None, :],
        x_p, u_node_p, params["message_mlp"], params["node_mlp"],
    )  # (N_pad, 384) bf16

    # ---- graph pooling (bf16 one-hot scatter matmuls, f32 accumulation)
    pooled_edges = segment_mean(
        new_edge_attr_p, eb_pad[None, :], B, weights_p=normalized_wts_p
    )  # (B, 384) f32
    pooled_nodes = segment_mean(new_x_p, nb_pad[None, :], B)  # (B, 384) f32
    graph_vecs = jnp.concatenate([pooled_edges, pooled_nodes], axis=1)  # (B, 768)

    return graph_vecs, u, normalized_wts_p[:E]


# ----------------------------------------------------------------------------
# main
# ----------------------------------------------------------------------------
if __name__ == "__main__":
    EMB_DIM = 768  # roberta-base embedding_dim
    U_DIM = 128
    VOCAB = 512
    N_NODES = 16
    N_EDGES = 32
    SEQ = 8  # token length (first token stripped inside forward)
    N_GRAPHS = 2

    key = jax.random.PRNGKey(0)
    kp, kx, ke, ku, k1, k2, k3, k4 = jax.random.split(key, 8)

    params = init_params(kp, VOCAB, EMB_DIM, U_DIM)

    x_tokens = jax.random.randint(kx, (N_NODES, SEQ), 0, VOCAB, dtype=jnp.int32)
    edge_tokens = jax.random.randint(ke, (N_EDGES, SEQ), 0, VOCAB, dtype=jnp.int32)
    # sprinkle some pad / sep tokens so the masking path is exercised
    x_tokens = x_tokens.at[:, -1].set(PAD_ID).at[:, -2].set(SEP_ID)
    edge_tokens = edge_tokens.at[:, -1].set(PAD_ID)

    u = jax.random.normal(ku, (N_GRAPHS, U_DIM), jnp.float32)

    node_batch = jnp.concatenate(
        [jnp.zeros((N_NODES // 2,), jnp.int32), jnp.ones((N_NODES // 2,), jnp.int32)]
    )
    # edges stay within their graph so edge_batch is consistent
    half_n, half_e = N_NODES // 2, N_EDGES // 2
    row0 = jax.random.randint(k1, (half_e,), 0, half_n, dtype=jnp.int32)
    col0 = jax.random.randint(k2, (half_e,), 0, half_n, dtype=jnp.int32)
    row1 = jax.random.randint(k3, (half_e,), half_n, N_NODES, dtype=jnp.int32)
    col1 = jax.random.randint(k4, (half_e,), half_n, N_NODES, dtype=jnp.int32)
    edge_index = jnp.stack(
        [jnp.concatenate([row0, row1]), jnp.concatenate([col0, col1])], axis=0
    )

    graph_vecs, u_out, normalized_wts = graph_network_forward(
        params, x_tokens, edge_index, edge_tokens, u, node_batch
    )
    jax.block_until_ready((graph_vecs, u_out, normalized_wts))

    assert graph_vecs.shape == (N_GRAPHS, 768)
    assert normalized_wts.shape == (N_EDGES, 1)
    assert bool(jnp.all(jnp.isfinite(graph_vecs)))
    assert bool(jnp.all(jnp.isfinite(normalized_wts)))
    print("KERNEL_OK")
</pallas_src>

<mosaic_0001>
module attributes {stable_mosaic.version = 11 : i64} {
  func.func @kernel(%arg0: i32, %arg1: memref<16x7x1xi32, #tpu.memory_space<vmem>>, %arg2: memref<512x768xbf16, #tpu.memory_space<vmem>>, %arg3: memref<16x768xbf16, #tpu.memory_space<vmem>>) attributes {dimension_semantics = [#tpu.dimension_semantics<parallel>], iteration_bounds = array<i64: 1>, scalar_prefetch = 0 : i64, scratch_operands = 0 : i64, tpu.core_type = #tpu.core_type<tc>, window_params = [{transform_indices = @transform_0, window_bounds = array<i64: 16, 7, 1>}, {pipeline_mode = #tpu.pipeline_mode<synchronous>, transform_indices = @transform_1, window_bounds = array<i64: 512, 768>}, {transform_indices = @transform_2, window_bounds = array<i64: 16, 768>}]} {
    %c0 = arith.constant 0 : index
    %c0_0 = arith.constant 0 : index
    %c0_1 = arith.constant 0 : index
    %0 = vector.load %arg1[%c0, %c0_0, %c0_1] : memref<16x7x1xi32, #tpu.memory_space<vmem>>, vector<16x7x1xi32>
    %c1_i32 = arith.constant 1 : i32
    %1 = vector.broadcast %c1_i32 : i32 to vector<16x7x1xi32>
    %2 = arith.cmpi eq, %0, %1 : vector<16x7x1xi32>
    %3 = arith.extui %2 : vector<16x7x1xi1> to vector<16x7x1xi32>
    %4 = arith.sitofp %3 : vector<16x7x1xi32> to vector<16x7x1xf32>
    %c2_i32 = arith.constant 2 : i32
    %5 = vector.broadcast %c2_i32 : i32 to vector<16x7x1xi32>
    %6 = arith.cmpi eq, %0, %5 : vector<16x7x1xi32>
    %7 = arith.extui %6 : vector<16x7x1xi1> to vector<16x7x1xi32>
    %8 = arith.sitofp %7 : vector<16x7x1xi32> to vector<16x7x1xf32>
    %9 = arith.addf %4, %8 : vector<16x7x1xf32>
    %cst = arith.constant 1.000000e+00 : f32
    %10 = vector.broadcast %cst : f32 to vector<16x7x1xf32>
    %11 = arith.subf %10, %9 : vector<16x7x1xf32>
    %12 = tpu.iota {dimensions = array<i32: 2>} : vector<16x7x512xi32>
    %13 = vector.broadcast %0 : vector<16x7x1xi32> to vector<16x7x512xi32>
    %14 = arith.cmpi eq, %12, %13 : vector<16x7x512xi32>
    %15 = arith.extui %14 : vector<16x7x512xi1> to vector<16x7x512xi32>
    %16 = arith.sitofp %15 : vector<16x7x512xi32> to vector<16x7x512xf32>
    %17 = vector.broadcast %11 : vector<16x7x1xf32> to vector<16x7x512xf32>
    %18 = arith.mulf %16, %17 : vector<16x7x512xf32>
    %cst_2 = arith.constant dense<0.000000e+00> : vector<16x512xf32>
    %19 = vector.multi_reduction <add>, %18, %cst_2 [1] : vector<16x7x512xf32> to vector<16x512xf32>
    %20 = arith.truncf %19 : vector<16x512xf32> to vector<16x512xbf16>
    %c0_3 = arith.constant 0 : index
    %c0_4 = arith.constant 0 : index
    %21 = vector.load %arg2[%c0_3, %c0_4] : memref<512x768xbf16, #tpu.memory_space<vmem>>, vector<512x768xbf16>
    %cst_5 = arith.constant dense<0.000000e+00> : vector<16x768xf32>
    %22 = tpu.matmul %20, %21, %cst_5 {dimension_numbers = #tpu.dot_dimension_numbers<[1], [0], [0], [1], [0, 0, 1, 1], [], []>} : vector<16x512xbf16>, vector<512x768xbf16>, vector<16x768xf32> -> vector<16x768xf32>
    %cst_6 = arith.constant 0.142857149 : f32
    %23 = vector.broadcast %cst_6 : f32 to vector<16x768xf32>
    %24 = arith.mulf %22, %23 : vector<16x768xf32>
    %25 = arith.truncf %24 : vector<16x768xf32> to vector<16x768xbf16>
    %c0_7 = arith.constant 0 : index
    %c0_8 = arith.constant 0 : index
    %26 = vector.load %arg3[%c0_7, %c0_8] : memref<16x768xbf16, #tpu.memory_space<vmem>>, vector<16x768xbf16>
    tpu.vector_store %arg3[%c0_7, %c0_8], %25 {strides = array<i32>} : memref<16x768xbf16, #tpu.memory_space<vmem>>, vector<16x768xbf16>,
    return
  }
  func.func @transform_0(%arg0: i32) -> (i32, i32, i32) {
    %c0_i32 = arith.constant 0 : i32
    %c0_i32_0 = arith.constant 0 : i32
    %c0_i32_1 = arith.constant 0 : i32
    return %arg0, %c0_i32, %c0_i32_0 : i32, i32, i32
  }
  func.func @transform_1(%arg0: i32) -> (i32, i32) {
    %c0_i32 = arith.constant 0 : i32
    %c0_i32_0 = arith.constant 0 : i32
    %c0_i32_1 = arith.constant 0 : i32
    return %c0_i32, %c0_i32_0 : i32, i32
  }
  func.func @transform_2(%arg0: i32) -> (i32, i32) {
    %c0_i32 = arith.constant 0 : i32
    %c0_i32_0 = arith.constant 0 : i32
    return %arg0, %c0_i32 : i32, i32
  }
}

</mosaic_0001>

<llo_original>
// kernel: tpu_custom_call.1
$region0: #{tpu_custom_call.1}
  #allocation0 [shape = 'u32[]', space=smem, size = 0x4, offset = 0x4, fixed_abs, tag = 'smem constant byte address 0x4 - core index']
  #allocation1 [shape = 'u32[144,128]{1,0:T(1,128)}', space=vmem, size = 0x12000, scoped, tag = 'internal scratch']
  %s0 = inlined_call_operand.vmem [shape: s32[16,7,1], index: 0, kind: input, shape index: {}]
  %s1 = inlined_call_operand.hbm [shape: bf16[512,768], index: 1, kind: input, shape index: {}]
  %s2 = inlined_call_operand.hbm [shape: bf16[16,768], index: 2, kind: output, shape index: {}]
  %s3 = sld [smem:[#allocation0]]
  $region22: #{tpu_custom_call.1} parent=0
    _
  %s5 = ssub.s32 1, %s3
  %s6 = scalar_select 0, %s5, %s3
  $region1: #{tpu_custom_call.1} parent=0
    #allocation2 [shape = 'u8[786432]{0}', space=vmem, size = 0xc0000, scoped, tag = 'input window, operand 1, single buffered']
    #allocation3 [shape = 's32[1]{0}', space=sflag, size = 0x4, scoped, tag = 'scoped memory for tpu_custom_call.1']
    #allocation4 [shape = 's32[1]{0}', space=sflag, size = 0x4, scoped, tag = 'scoped memory for tpu_custom_call.1']
    #allocation5 [shape = 'u8[24576]{0}', space=vmem, size = 0x6000, scoped, tag = 'output window, operand 0, single buffered']
    %7 = vsyncpa [#allocation3], 0
    %8 = vsyncpa [#allocation4], 0
    // Predicated region
    $region2: #{tpu_custom_call.1} parent=1 // pred_check
      _
    $region3: #{tpu_custom_call.1} parent=1 // pred_check_branch
      %10 = sbr.rel (0) target = $region5
    $region4: #{tpu_custom_call.1} parent=1 // pred_region
      _
    $region5: #{tpu_custom_call.1} parent=1 // pred_fallthru
      _
    // Predicated region
    $region6: #{tpu_custom_call.1} parent=1 // pred_check
      _
    $region7: #{tpu_custom_call.1} parent=1 // pred_check_branch
      %12 = sbr.rel (0) target = $region9
    $region8: #{tpu_custom_call.1} parent=1 // pred_region
      %s14 = ssub.s32 24576, 24576
      %15 = vsyncadd [#allocation3], %s14
      %s16 = sshll.u32 [#allocation2], 4
      %s17 = int_to_ptr.vmem [resolvable:$true] %s16
      %22 = dma.hbm_to_vmem [thread:$0]  %s1, 24576, %s17, [#allocation3], 384, 384, 24
    $region9: #{tpu_custom_call.1} parent=1 // pred_fallthru
      _
    // Predicated region
    $region10: #{tpu_custom_call.1} parent=1 // pred_check
      _
    $region11: #{tpu_custom_call.1} parent=1 // pred_check_branch
      %24 = sbr.rel (0) target = $region13
    $region12: #{tpu_custom_call.1} parent=1 // pred_region
      %25 = dma.done [#allocation3], 24576
    $region13: #{tpu_custom_call.1} parent=1 // pred_fallthru
      _
    %v26 = vld [vmem:[%s0] sm:$0x7f]
    %v27 = vld [vmem:[%s0 + $0x8] sm:$0x7f]
    %v28 = vld [vmem:[%s0 + $0x10] sm:$0x7f]
    %v29 = vld [vmem:[%s0 + $0x18] sm:$0x7f]
    %v30 = vld [vmem:[%s0 + $0x20] sm:$0x7f]
    %v31 = vld [vmem:[%s0 + $0x28] sm:$0x7f]
    %v32 = vld [vmem:[%s0 + $0x30] sm:$0x7f]
    %v33 = vld [vmem:[%s0 + $0x38] sm:$0x7f]
    %v34 = vld [vmem:[%s0 + $0x40] sm:$0x7f]
    %v35 = vld [vmem:[%s0 + $0x48] sm:$0x7f]
    %v36 = vld [vmem:[%s0 + $0x50] sm:$0x7f]
    %v37 = vld [vmem:[%s0 + $0x58] sm:$0x7f]
    %v38 = vld [vmem:[%s0 + $0x60] sm:$0x7f]
    %v39 = vld [vmem:[%s0 + $0x68] sm:$0x7f]
    %v40 = vld [vmem:[%s0 + $0x70] sm:$0x7f]
    %v41 = vld [vmem:[%s0 + $0x78] sm:$0x7f]
    %vm42 = vcmp.eq.s32.totalorder %v26, 1
    %vm43 = vcmp.eq.s32.totalorder %v27, 1
    %vm44 = vcmp.eq.s32.totalorder %v28, 1
    %vm45 = vcmp.eq.s32.totalorder %v29, 1
    %vm46 = vcmp.eq.s32.totalorder %v30, 1
    %vm47 = vcmp.eq.s32.totalorder %v31, 1
    %vm48 = vcmp.eq.s32.totalorder %v32, 1
    %vm49 = vcmp.eq.s32.totalorder %v33, 1
    %vm50 = vcmp.eq.s32.totalorder %v34, 1
    %vm51 = vcmp.eq.s32.totalorder %v35, 1
    %vm52 = vcmp.eq.s32.totalorder %v36, 1
    %vm53 = vcmp.eq.s32.totalorder %v37, 1
    %vm54 = vcmp.eq.s32.totalorder %v38, 1
    %vm55 = vcmp.eq.s32.totalorder %v39, 1
    %vm56 = vcmp.eq.s32.totalorder %v40, 1
    %vm57 = vcmp.eq.s32.totalorder %v41, 1
    %v58 = vsel %vm42, 1, 0
    %v59 = vsel %vm43, 1, 0
    %v60 = vsel %vm44, 1, 0
    %v61 = vsel %vm45, 1, 0
    %v62 = vsel %vm46, 1, 0
    %v63 = vsel %vm47, 1, 0
    %v64 = vsel %vm48, 1, 0
    %v65 = vsel %vm49, 1, 0
    %v66 = vsel %vm50, 1, 0
    %v67 = vsel %vm51, 1, 0
    %v68 = vsel %vm52, 1, 0
    %v69 = vsel %vm53, 1, 0
    %v70 = vsel %vm54, 1, 0
    %v71 = vsel %vm55, 1, 0
    %v72 = vsel %vm56, 1, 0
    %v73 = vsel %vm57, 1, 0
    %v74 = vcvt.s32.f32 %v58
    %v75 = vcvt.s32.f32 %v59
    %v76 = vcvt.s32.f32 %v60
    %v77 = vcvt.s32.f32 %v61
    %v78 = vcvt.s32.f32 %v62
    %v79 = vcvt.s32.f32 %v63
    %v80 = vcvt.s32.f32 %v64
    %v81 = vcvt.s32.f32 %v65
    %v82 = vcvt.s32.f32 %v66
    %v83 = vcvt.s32.f32 %v67
    %v84 = vcvt.s32.f32 %v68
    %v85 = vcvt.s32.f32 %v69
    %v86 = vcvt.s32.f32 %v70
    %v87 = vcvt.s32.f32 %v71
    %v88 = vcvt.s32.f32 %v72
    %v89 = vcvt.s32.f32 %v73
    %vm90 = vcmp.eq.s32.totalorder %v26, 2
    %vm91 = vcmp.eq.s32.totalorder %v27, 2
    %vm92 = vcmp.eq.s32.totalorder %v28, 2
    %vm93 = vcmp.eq.s32.totalorder %v29, 2
    %vm94 = vcmp.eq.s32.totalorder %v30, 2
    %vm95 = vcmp.eq.s32.totalorder %v31, 2
    %vm96 = vcmp.eq.s32.totalorder %v32, 2
    %vm97 = vcmp.eq.s32.totalorder %v33, 2
    %vm98 = vcmp.eq.s32.totalorder %v34, 2
    %vm99 = vcmp.eq.s32.totalorder %v35, 2
    %vm100 = vcmp.eq.s32.totalorder %v36, 2
    %vm101 = vcmp.eq.s32.totalorder %v37, 2
    %vm102 = vcmp.eq.s32.totalorder %v38, 2
    %vm103 = vcmp.eq.s32.totalorder %v39, 2
    %vm104 = vcmp.eq.s32.totalorder %v40, 2
    %vm105 = vcmp.eq.s32.totalorder %v41, 2
    %v106 = vsel %vm90, 1, 0
    %v107 = vsel %vm91, 1, 0
    %v108 = vsel %vm92, 1, 0
    %v109 = vsel %vm93, 1, 0
    %v110 = vsel %vm94, 1, 0
    %v111 = vsel %vm95, 1, 0
    %v112 = vsel %vm96, 1, 0
    %v113 = vsel %vm97, 1, 0
    %v114 = vsel %vm98, 1, 0
    %v115 = vsel %vm99, 1, 0
    %v116 = vsel %vm100, 1, 0
    %v117 = vsel %vm101, 1, 0
    %v118 = vsel %vm102, 1, 0
    %v119 = vsel %vm103, 1, 0
    %v120 = vsel %vm104, 1, 0
    %v121 = vsel %vm105, 1, 0
    %v122 = vcvt.s32.f32 %v106
    %v123 = vcvt.s32.f32 %v107
    %v124 = vcvt.s32.f32 %v108
    %v125 = vcvt.s32.f32 %v109
    %v126 = vcvt.s32.f32 %v110
    %v127 = vcvt.s32.f32 %v111
    %v128 = vcvt.s32.f32 %v112
    %v129 = vcvt.s32.f32 %v113
    %v130 = vcvt.s32.f32 %v114
    %v131 = vcvt.s32.f32 %v115
    %v132 = vcvt.s32.f32 %v116
    %v133 = vcvt.s32.f32 %v117
    %v134 = vcvt.s32.f32 %v118
    %v135 = vcvt.s32.f32 %v119
    %v136 = vcvt.s32.f32 %v120
    %v137 = vcvt.s32.f32 %v121
    %v138 = vadd.f32 %v74, %v122
    %v139 = vadd.f32 %v75, %v123
    %v140 = vadd.f32 %v76, %v124
    %v141 = vadd.f32 %v77, %v125
    %v142 = vadd.f32 %v78, %v126
    %v143 = vadd.f32 %v79, %v127
    %v144 = vadd.f32 %v80, %v128
    %v145 = vadd.f32 %v81, %v129
    %v146 = vadd.f32 %v82, %v130
    %v147 = vadd.f32 %v83, %v131
    %v148 = vadd.f32 %v84, %v132
    %v149 = vadd.f32 %v85, %v133
    %v150 = vadd.f32 %v86, %v134
    %v151 = vadd.f32 %v87, %v135
    %v152 = vadd.f32 %v88, %v136
    %v153 = vadd.f32 %v89, %v137
    %v154 = vsub.f32 1.0, %v138
    %v155 = vsub.f32 1.0, %v139
    %v156 = vsub.f32 1.0, %v140
    %v157 = vsub.f32 1.0, %v141
    %v158 = vsub.f32 1.0, %v142
    %v159 = vsub.f32 1.0, %v143
    %v160 = vsub.f32 1.0, %v144
    %v161 = vsub.f32 1.0, %v145
    %v162 = vsub.f32 1.0, %v146
    %v163 = vsub.f32 1.0, %v147
    %v164 = vsub.f32 1.0, %v148
    %v165 = vsub.f32 1.0, %v149
    %v166 = vsub.f32 1.0, %v150
    %v167 = vsub.f32 1.0, %v151
    %v168 = vsub.f32 1.0, %v152
    %v169 = vsub.f32 1.0, %v153
    %v170 = vlaneseq
    %v171 = vand.u32 %v170, 127
    %v172 = vadd.s32 %v171, 128
    %v173 = vadd.s32 %v171, 256
    %v174 = vadd.s32 %v171, 384
    %175 = vset.pattern.permute.xlu0 0
    %176 = vperm.xlu0 %175, %v26
    %v177 = vpop.permute.xlu0 %176
    %178 = vset.pattern.permute.xlu0 0
    %179 = vperm.xlu0 %178, %v27
    %v180 = vpop.permute.xlu0 %179
    %181 = vset.pattern.permute.xlu0 0
    %182 = vperm.xlu0 %181, %v28
    %v183 = vpop.permute.xlu0 %182
    %184 = vset.pattern.permute.xlu0 0
    %185 = vperm.xlu0 %184, %v29
    %v186 = vpop.permute.xlu0 %185
    %187 = vset.pattern.permute.xlu0 0
    %188 = vperm.xlu0 %187, %v30
    %v189 = vpop.permute.xlu0 %188
    %190 = vset.pattern.permute.xlu0 0
    %191 = vperm.xlu0 %190, %v31
    %v192 = vpop.permute.xlu0 %191
    %193 = vset.pattern.permute.xlu0 0
    %194 = vperm.xlu0 %193, %v32
    %v195 = vpop.permute.xlu0 %194
    %196 = vset.pattern.permute.xlu0 0
    %197 = vperm.xlu0 %196, %v33
    %v198 = vpop.permute.xlu0 %197
    %199 = vset.pattern.permute.xlu0 0
    %200 = vperm.xlu0 %199, %v34
    %v201 = vpop.permute.xlu0 %200
    %202 = vset.pattern.permute.xlu0 0
    %203 = vperm.xlu0 %202, %v35
    %v204 = vpop.permute.xlu0 %203
    %205 = vset.pattern.permute.xlu0 0
    %206 = vperm.xlu0 %205, %v36
    %v207 = vpop.permute.xlu0 %206
    %208 = vset.pattern.permute.xlu0 0
    %209 = vperm.xlu0 %208, %v37
    %v210 = vpop.permute.xlu0 %209
    %211 = vset.pattern.permute.xlu0 0
    %212 = vperm.xlu0 %211, %v38
    %v213 = vpop.permute.xlu0 %212
    %214 = vset.pattern.permute.xlu0 0
    %215 = vperm.xlu0 %214, %v39
    %v216 = vpop.permute.xlu0 %215
    %217 = vset.pattern.permute.xlu0 0
    %218 = vperm.xlu0 %217, %v40
    %v219 = vpop.permute.xlu0 %218
    %220 = vset.pattern.permute.xlu0 0
    %221 = vperm.xlu0 %220, %v41
    %v222 = vpop.permute.xlu0 %221
    %vm223 = vcmp.eq.s32.totalorder %v171, %v177
    %vm224 = vcmp.eq.s32.totalorder %v172, %v177
    %vm225 = vcmp.eq.s32.totalorder %v173, %v177
    %vm226 = vcmp.eq.s32.totalorder %v174, %v177
    %vm227 = vcmp.eq.s32.totalorder %v171, %v180
    %vm228 = vcmp.eq.s32.totalorder %v172, %v180
    %vm229 = vcmp.eq.s32.totalorder %v173, %v180
    %vm230 = vcmp.eq.s32.totalorder %v174, %v180
    %vm231 = vcmp.eq.s32.totalorder %v171, %v183
    %vm232 = vcmp.eq.s32.totalorder %v172, %v183
    %vm233 = vcmp.eq.s32.totalorder %v173, %v183
    %vm234 = vcmp.eq.s32.totalorder %v174, %v183
    %vm235 = vcmp.eq.s32.totalorder %v171, %v186
    %vm236 = vcmp.eq.s32.totalorder %v172, %v186
    %vm237 = vcmp.eq.s32.totalorder %v173, %v186
    %vm238 = vcmp.eq.s32.totalorder %v174, %v186
    %vm239 = vcmp.eq.s32.totalorder %v171, %v189
    %vm240 = vcmp.eq.s32.totalorder %v172, %v189
    %vm241 = vcmp.eq.s32.totalorder %v173, %v189
    %vm242 = vcmp.eq.s32.totalorder %v174, %v189
    %vm243 = vcmp.eq.s32.totalorder %v171, %v192
    %vm244 = vcmp.eq.s32.totalorder %v172, %v192
    %vm245 = vcmp.eq.s32.totalorder %v173, %v192
    %vm246 = vcmp.eq.s32.totalorder %v174, %v192
    %vm247 = vcmp.eq.s32.totalorder %v171, %v195
    %vm248 = vcmp.eq.s32.totalorder %v172, %v195
    %vm249 = vcmp.eq.s32.totalorder %v173, %v195
    %vm250 = vcmp.eq.s32.totalorder %v174, %v195
    %vm251 = vcmp.eq.s32.totalorder %v171, %v198
    %vm252 = vcmp.eq.s32.totalorder %v172, %v198
    %vm253 = vcmp.eq.s32.totalorder %v173, %v198
    %vm254 = vcmp.eq.s32.totalorder %v174, %v198
    %vm255 = vcmp.eq.s32.totalorder %v171, %v201
    %vm256 = vcmp.eq.s32.totalorder %v172, %v201
    %vm257 = vcmp.eq.s32.totalorder %v173, %v201
    %vm258 = vcmp.eq.s32.totalorder %v174, %v201
    %vm259 = vcmp.eq.s32.totalorder %v171, %v204
    %vm260 = vcmp.eq.s32.totalorder %v172, %v204
    %vm261 = vcmp.eq.s32.totalorder %v173, %v204
    %vm262 = vcmp.eq.s32.totalorder %v174, %v204
    %vm263 = vcmp.eq.s32.totalorder %v171, %v207
    %vm264 = vcmp.eq.s32.totalorder %v172, %v207
    %vm265 = vcmp.eq.s32.totalorder %v173, %v207
    %vm266 = vcmp.eq.s32.totalorder %v174, %v207
    %vm267 = vcmp.eq.s32.totalorder %v171, %v210
    %vm268 = vcmp.eq.s32.totalorder %v172, %v210
    %vm269 = vcmp.eq.s32.totalorder %v173, %v210
    %vm270 = vcmp.eq.s32.totalorder %v174, %v210
    %vm271 = vcmp.eq.s32.totalorder %v171, %v213
    %vm272 = vcmp.eq.s32.totalorder %v172, %v213
    %vm273 = vcmp.eq.s32.totalorder %v173, %v213
    %vm274 = vcmp.eq.s32.totalorder %v174, %v213
    %vm275 = vcmp.eq.s32.totalorder %v171, %v216
    %vm276 = vcmp.eq.s32.totalorder %v172, %v216
    %vm277 = vcmp.eq.s32.totalorder %v173, %v216
    %vm278 = vcmp.eq.s32.totalorder %v174, %v216
    %vm279 = vcmp.eq.s32.totalorder %v171, %v219
    %vm280 = vcmp.eq.s32.totalorder %v172, %v219
    %vm281 = vcmp.eq.s32.totalorder %v173, %v219
    %vm282 = vcmp.eq.s32.totalorder %v174, %v219
    %vm283 = vcmp.eq.s32.totalorder %v171, %v222
    %vm284 = vcmp.eq.s32.totalorder %v172, %v222
    %vm285 = vcmp.eq.s32.totalorder %v173, %v222
    %vm286 = vcmp.eq.s32.totalorder %v174, %v222
    %v287 = vsel %vm223, 1, 0
    %v288 = vsel %vm224, 1, 0
    %v289 = vsel %vm225, 1, 0
    %v290 = vsel %vm226, 1, 0
    %v291 = vsel %vm227, 1, 0
    %v292 = vsel %vm228, 1, 0
    %v293 = vsel %vm229, 1, 0
    %v294 = vsel %vm230, 1, 0
    %v295 = vsel %vm231, 1, 0
    %v296 = vsel %vm232, 1, 0
    %v297 = vsel %vm233, 1, 0
    %v298 = vsel %vm234, 1, 0
    %v299 = vsel %vm235, 1, 0
    %v300 = vsel %vm236, 1, 0
    %v301 = vsel %vm237, 1, 0
    %v302 = vsel %vm238, 1, 0
    %v303 = vsel %vm239, 1, 0
    %v304 = vsel %vm240, 1, 0
    %v305 = vsel %vm241, 1, 0
    %v306 = vsel %vm242, 1, 0
    %v307 = vsel %vm243, 1, 0
    %v308 = vsel %vm244, 1, 0
    %v309 = vsel %vm245, 1, 0
    %v310 = vsel %vm246, 1, 0
    %v311 = vsel %vm247, 1, 0
    %v312 = vsel %vm248, 1, 0
    %v313 = vsel %vm249, 1, 0
    %v314 = vsel %vm250, 1, 0
    %v315 = vsel %vm251, 1, 0
    %v316 = vsel %vm252, 1, 0
    %v317 = vsel %vm253, 1, 0
    %v318 = vsel %vm254, 1, 0
    %v319 = vsel %vm255, 1, 0
    %v320 = vsel %vm256, 1, 0
    %v321 = vsel %vm257, 1, 0
    %v322 = vsel %vm258, 1, 0
    %v323 = vsel %vm259, 1, 0
    %v324 = vsel %vm260, 1, 0
    %v325 = vsel %vm261, 1, 0
    %v326 = vsel %vm262, 1, 0
    %v327 = vsel %vm263, 1, 0
    %v328 = vsel %vm264, 1, 0
    %v329 = vsel %vm265, 1, 0
    %v330 = vsel %vm266, 1, 0
    %v331 = vsel %vm267, 1, 0
    %v332 = vsel %vm268, 1, 0
    %v333 = vsel %vm269, 1, 0
    %v334 = vsel %vm270, 1, 0
    %v335 = vsel %vm271, 1, 0
    %v336 = vsel %vm272, 1, 0
    %v337 = vsel %vm273, 1, 0
    %v338 = vsel %vm274, 1, 0
    %v339 = vsel %vm275, 1, 0
    %v340 = vsel %vm276, 1, 0
    %v341 = vsel %vm277, 1, 0
    %v342 = vsel %vm278, 1, 0
    %v343 = vsel %vm279, 1, 0
    %v344 = vsel %vm280, 1, 0
    %v345 = vsel %vm281, 1, 0
    %v346 = vsel %vm282, 1, 0
    %v347 = vsel %vm283, 1, 0
    %v348 = vsel %vm284, 1, 0
    %v349 = vsel %vm285, 1, 0
    %v350 = vsel %vm286, 1, 0
    %v351 = vcvt.s32.f32 %v287
    %v352 = vcvt.s32.f32 %v288
    %v353 = vcvt.s32.f32 %v289
    %v354 = vcvt.s32.f32 %v290
    %v355 = vcvt.s32.f32 %v291
    %v356 = vcvt.s32.f32 %v292
    %v357 = vcvt.s32.f32 %v293
    %v358 = vcvt.s32.f32 %v294
    %v359 = vcvt.s32.f32 %v295
    %v360 = vcvt.s32.f32 %v296
    %v361 = vcvt.s32.f32 %v297
    %v362 = vcvt.s32.f32 %v298
    %v363 = vcvt.s32.f32 %v299
    %v364 = vcvt.s32.f32 %v300
    %v365 = vcvt.s32.f32 %v301
    %v366 = vcvt.s32.f32 %v302
    %v367 = vcvt.s32.f32 %v303
    %v368 = vcvt.s32.f32 %v304
    %v369 = vcvt.s32.f32 %v305
    %v370 = vcvt.s32.f32 %v306
    %v371 = vcvt.s32.f32 %v307
    %v372 = vcvt.s32.f32 %v308
    %v373 = vcvt.s32.f32 %v309
    %v374 = vcvt.s32.f32 %v310
    %v375 = vcvt.s32.f32 %v311
    %v376 = vcvt.s32.f32 %v312
    %v377 = vcvt.s32.f32 %v313
    %v378 = vcvt.s32.f32 %v314
    %v379 = vcvt.s32.f32 %v315
    %v380 = vcvt.s32.f32 %v316
    %v381 = vcvt.s32.f32 %v317
    %v382 = vcvt.s32.f32 %v318
    %v383 = vcvt.s32.f32 %v319
    %v384 = vcvt.s32.f32 %v320
    %v385 = vcvt.s32.f32 %v321
    %v386 = vcvt.s32.f32 %v322
    %v387 = vcvt.s32.f32 %v323
    %v388 = vcvt.s32.f32 %v324
    %v389 = vcvt.s32.f32 %v325
    %v390 = vcvt.s32.f32 %v326
    %v391 = vcvt.s32.f32 %v327
    %v392 = vcvt.s32.f32 %v328
    %v393 = vcvt.s32.f32 %v329
    %v394 = vcvt.s32.f32 %v330
    %v395 = vcvt.s32.f32 %v331
    %v396 = vcvt.s32.f32 %v332
    %v397 = vcvt.s32.f32 %v333
    %v398 = vcvt.s32.f32 %v334
    %v399 = vcvt.s32.f32 %v335
    %v400 = vcvt.s32.f32 %v336
    %v401 = vcvt.s32.f32 %v337
    %v402 = vcvt.s32.f32 %v338
    %v403 = vcvt.s32.f32 %v339
    %v404 = vcvt.s32.f32 %v340
    %v405 = vcvt.s32.f32 %v341
    %v406 = vcvt.s32.f32 %v342
    %v407 = vcvt.s32.f32 %v343
    %v408 = vcvt.s32.f32 %v344
    %v409 = vcvt.s32.f32 %v345
    %v410 = vcvt.s32.f32 %v346
    %v411 = vcvt.s32.f32 %v347
    %v412 = vcvt.s32.f32 %v348
    %v413 = vcvt.s32.f32 %v349
    %v414 = vcvt.s32.f32 %v350
    %416 = vset.pattern.permute.xlu0 0
    %417 = vperm.xlu0 %416, %v154
    %v418 = vpop.permute.xlu0 %417
    %421 = vset.pattern.permute.xlu0 0
    %422 = vperm.xlu0 %421, %v155
    %v423 = vpop.permute.xlu0 %422
    %426 = vset.pattern.permute.xlu0 0
    %427 = vperm.xlu0 %426, %v156
    %v428 = vpop.permute.xlu0 %427
    %431 = vset.pattern.permute.xlu0 0
    %432 = vperm.xlu0 %431, %v157
    %v433 = vpop.permute.xlu0 %432
    %436 = vset.pattern.permute.xlu0 0
    %437 = vperm.xlu0 %436, %v158
    %v438 = vpop.permute.xlu0 %437
    %441 = vset.pattern.permute.xlu0 0
    %442 = vperm.xlu0 %441, %v159
    %v443 = vpop.permute.xlu0 %442
    %446 = vset.pattern.permute.xlu0 0
    %447 = vperm.xlu0 %446, %v160
    %v448 = vpop.permute.xlu0 %447
    %451 = vset.pattern.permute.xlu0 0
    %452 = vperm.xlu0 %451, %v161
    %v453 = vpop.permute.xlu0 %452
    %456 = vset.pattern.permute.xlu0 0
    %457 = vperm.xlu0 %456, %v162
    %v458 = vpop.permute.xlu0 %457
    %461 = vset.pattern.permute.xlu0 0
    %462 = vperm.xlu0 %461, %v163
    %v463 = vpop.permute.xlu0 %462
    %466 = vset.pattern.permute.xlu0 0
    %467 = vperm.xlu0 %466, %v164
    %v468 = vpop.permute.xlu0 %467
    %471 = vset.pattern.permute.xlu0 0
    %472 = vperm.xlu0 %471, %v165
    %v473 = vpop.permute.xlu0 %472
    %476 = vset.pattern.permute.xlu0 0
    %477 = vperm.xlu0 %476, %v166
    %v478 = vpop.permute.xlu0 %477
    %481 = vset.pattern.permute.xlu0 0
    %482 = vperm.xlu0 %481, %v167
    %v483 = vpop.permute.xlu0 %482
    %486 = vset.pattern.permute.xlu0 0
    %487 = vperm.xlu0 %486, %v168
    %v488 = vpop.permute.xlu0 %487
    %491 = vset.pattern.permute.xlu0 0
    %492 = vperm.xlu0 %491, %v169
    %v493 = vpop.permute.xlu0 %492
    %v495 = vmul.f32 %v351, %v418
    %v496 = vmul.f32 %v352, %v418
    %v497 = vmul.f32 %v353, %v418
    %v498 = vmul.f32 %v354, %v418
    %v499 = vmul.f32 %v355, %v423
    %v500 = vmul.f32 %v356, %v423
    %v501 = vmul.f32 %v357, %v423
    %v502 = vmul.f32 %v358, %v423
    %v503 = vmul.f32 %v359, %v428
    %v504 = vmul.f32 %v360, %v428
    %v505 = vmul.f32 %v361, %v428
    %v506 = vmul.f32 %v362, %v428
    %v507 = vmul.f32 %v363, %v433
    %v508 = vmul.f32 %v364, %v433
    %v509 = vmul.f32 %v365, %v433
    %v510 = vmul.f32 %v366, %v433
    %v511 = vmul.f32 %v367, %v438
    %v512 = vmul.f32 %v368, %v438
    %v513 = vmul.f32 %v369, %v438
    %v514 = vmul.f32 %v370, %v438
    %v515 = vmul.f32 %v371, %v443
    %v516 = vmul.f32 %v372, %v443
    %v517 = vmul.f32 %v373, %v443
    %v518 = vmul.f32 %v374, %v443
    %v519 = vmul.f32 %v375, %v448
    %v520 = vmul.f32 %v376, %v448
    %v521 = vmul.f32 %v377, %v448
    %v522 = vmul.f32 %v378, %v448
    %v523 = vmul.f32 %v379, %v453
    %v524 = vmul.f32 %v380, %v453
    %v525 = vmul.f32 %v381, %v453
    %v526 = vmul.f32 %v382, %v453
    %v527 = vmul.f32 %v383, %v458
    %v528 = vmul.f32 %v384, %v458
    %v529 = vmul.f32 %v385, %v458
    %v530 = vmul.f32 %v386, %v458
    %v531 = vmul.f32 %v387, %v463
    %v532 = vmul.f32 %v388, %v463
    %v533 = vmul.f32 %v389, %v463
    %v534 = vmul.f32 %v390, %v463
    %v535 = vmul.f32 %v391, %v468
    %v536 = vmul.f32 %v392, %v468
    %v537 = vmul.f32 %v393, %v468
    %v538 = vmul.f32 %v394, %v468
    %v539 = vmul.f32 %v395, %v473
    %v540 = vmul.f32 %v396, %v473
    %v541 = vmul.f32 %v397, %v473
    %v542 = vmul.f32 %v398, %v473
    %v543 = vmul.f32 %v399, %v478
    %v544 = vmul.f32 %v400, %v478
    %v545 = vmul.f32 %v401, %v478
    %v546 = vmul.f32 %v402, %v478
    %v547 = vmul.f32 %v403, %v483
    %v548 = vmul.f32 %v404, %v483
    %v549 = vmul.f32 %v405, %v483
    %v550 = vmul.f32 %v406, %v483
    %v551 = vmul.f32 %v407, %v488
    %v552 = vmul.f32 %v408, %v488
    %v553 = vmul.f32 %v409, %v488
    %v554 = vmul.f32 %v410, %v488
    %v555 = vmul.f32 %v411, %v493
    %v556 = vmul.f32 %v412, %v493
    %v557 = vmul.f32 %v413, %v493
    %v558 = vmul.f32 %v414, %v493
    %vm559 = vcmask 1046528
    %v560 = vsel %vm559, %v495, 0.0
    %v561 = vrot.slane %v560, 4
    %v562 = vadd.f32 %v560, %v561
    %v563 = vrot.slane %v562, 2
    %v564 = vadd.f32 %v562, %v563
    %v565 = vrot.slane %v564, 1
    %v566 = vadd.f32 %v564, %v565
    %v567 = vsel %vm559, %v496, 0.0
    %v568 = vrot.slane %v567, 4
    %v569 = vadd.f32 %v567, %v568
    %v570 = vrot.slane %v569, 2
    %v571 = vadd.f32 %v569, %v570
    %v572 = vrot.slane %v571, 1
    %v573 = vadd.f32 %v571, %v572
    %v574 = vsel %vm559, %v497, 0.0
    %v575 = vrot.slane %v574, 4
    %v576 = vadd.f32 %v574, %v575
    %v577 = vrot.slane %v576, 2
    %v578 = vadd.f32 %v576, %v577
    %v579 = vrot.slane %v578, 1
    %v580 = vadd.f32 %v578, %v579
    %v581 = vsel %vm559, %v498, 0.0
    %v582 = vrot.slane %v581, 4
    %v583 = vadd.f32 %v581, %v582
    %v584 = vrot.slane %v583, 2
    %v585 = vadd.f32 %v583, %v584
    %v586 = vrot.slane %v585, 1
    %v587 = vadd.f32 %v585, %v586
    %v588 = vsel %vm559, %v499, 0.0
    %v589 = vrot.slane %v588, 4
    %v590 = vadd.f32 %v588, %v589
    %v591 = vrot.slane %v590, 2
    %v592 = vadd.f32 %v590, %v591
    %v593 = vrot.slane %v592, 1
    %v594 = vadd.f32 %v592, %v593
    %v595 = vsel %vm559, %v500, 0.0
    %v596 = vrot.slane %v595, 4
    %v597 = vadd.f32 %v595, %v596
    %v598 = vrot.slane %v597, 2
    %v599 = vadd.f32 %v597, %v598
    %v600 = vrot.slane %v599, 1
    %v601 = vadd.f32 %v599, %v600
    %v602 = vsel %vm559, %v501, 0.0
    %v603 = vrot.slane %v602, 4
    %v604 = vadd.f32 %v602, %v603
    %v605 = vrot.slane %v604, 2
    %v606 = vadd.f32 %v604, %v605
    %v607 = vrot.slane %v606, 1
    %v608 = vadd.f32 %v606, %v607
    %v609 = vsel %vm559, %v502, 0.0
    %v610 = vrot.slane %v609, 4
    %v611 = vadd.f32 %v609, %v610
    %v612 = vrot.slane %v611, 2
    %v613 = vadd.f32 %v611, %v612
    %v614 = vrot.slane %v613, 1
    %v615 = vadd.f32 %v613, %v614
    %v616 = vsel %vm559, %v503, 0.0
    %v617 = vrot.slane %v616, 4
    %v618 = vadd.f32 %v616, %v617
    %v619 = vrot.slane %v618, 2
    %v620 = vadd.f32 %v618, %v619
    %v621 = vrot.slane %v620, 1
    %v622 = vadd.f32 %v620, %v621
    %v623 = vsel %vm559, %v504, 0.0
    %v624 = vrot.slane %v623, 4
    %v625 = vadd.f32 %v623, %v624
    %v626 = vrot.slane %v625, 2
    %v627 = vadd.f32 %v625, %v626
    %v628 = vrot.slane %v627, 1
    %v629 = vadd.f32 %v627, %v628
    %v630 = vsel %vm559, %v505, 0.0
    %v631 = vrot.slane %v630, 4
    %v632 = vadd.f32 %v630, %v631
    %v633 = vrot.slane %v632, 2
    %v634 = vadd.f32 %v632, %v633
    %v635 = vrot.slane %v634, 1
    %v636 = vadd.f32 %v634, %v635
    %v637 = vsel %vm559, %v506, 0.0
    %v638 = vrot.slane %v637, 4
    %v639 = vadd.f32 %v637, %v638
    %v640 = vrot.slane %v639, 2
    %v641 = vadd.f32 %v639, %v640
    %v642 = vrot.slane %v641, 1
    %v643 = vadd.f32 %v641, %v642
    %v644 = vsel %vm559, %v507, 0.0
    %v645 = vrot.slane %v644, 4
    %v646 = vadd.f32 %v644, %v645
    %v647 = vrot.slane %v646, 2
    %v648 = vadd.f32 %v646, %v647
    %v649 = vrot.slane %v648, 1
    %v650 = vadd.f32 %v648, %v649
    %v651 = vsel %vm559, %v508, 0.0
    %v652 = vrot.slane %v651, 4
    %v653 = vadd.f32 %v651, %v652
    %v654 = vrot.slane %v653, 2
    %v655 = vadd.f32 %v653, %v654
    %v656 = vrot.slane %v655, 1
    %v657 = vadd.f32 %v655, %v656
    %v658 = vsel %vm559, %v509, 0.0
    %v659 = vrot.slane %v658, 4
    %v660 = vadd.f32 %v658, %v659
    %v661 = vrot.slane %v660, 2
    %v662 = vadd.f32 %v660, %v661
    %v663 = vrot.slane %v662, 1
    %v664 = vadd.f32 %v662, %v663
    %v665 = vsel %vm559, %v510, 0.0
    %v666 = vrot.slane %v665, 4
    %v667 = vadd.f32 %v665, %v666
    %v668 = vrot.slane %v667, 2
    %v669 = vadd.f32 %v667, %v668
    %v670 = vrot.slane %v669, 1
    %v671 = vadd.f32 %v669, %v670
    %v672 = vsel %vm559, %v511, 0.0
    %v673 = vrot.slane %v672, 4
    %v674 = vadd.f32 %v672, %v673
    %v675 = vrot.slane %v674, 2
    %v676 = vadd.f32 %v674, %v675
    %v677 = vrot.slane %v676, 1
    %v678 = vadd.f32 %v676, %v677
    %v679 = vsel %vm559, %v512, 0.0
    %v680 = vrot.slane %v679, 4
    %v681 = vadd.f32 %v679, %v680
    %v682 = vrot.slane %v681, 2
    %v683 = vadd.f32 %v681, %v682
    %v684 = vrot.slane %v683, 1
    %v685 = vadd.f32 %v683, %v684
    %v686 = vsel %vm559, %v513, 0.0
    %v687 = vrot.slane %v686, 4
    %v688 = vadd.f32 %v686, %v687
    %v689 = vrot.slane %v688, 2
    %v690 = vadd.f32 %v688, %v689
    %v691 = vrot.slane %v690, 1
    %v692 = vadd.f32 %v690, %v691
    %v693 = vsel %vm559, %v514, 0.0
    %v694 = vrot.slane %v693, 4
    %v695 = vadd.f32 %v693, %v694
    %v696 = vrot.slane %v695, 2
    %v697 = vadd.f32 %v695, %v696
    %v698 = vrot.slane %v697, 1
    %v699 = vadd.f32 %v697, %v698
    %v700 = vsel %vm559, %v515, 0.0
    %v701 = vrot.slane %v700, 4
    %v702 = vadd.f32 %v700, %v701
    %v703 = vrot.slane %v702, 2
    %v704 = vadd.f32 %v702, %v703
    %v705 = vrot.slane %v704, 1
    %v706 = vadd.f32 %v704, %v705
    %v707 = vsel %vm559, %v516, 0.0
    %v708 = vrot.slane %v707, 4
    %v709 = vadd.f32 %v707, %v708
    %v710 = vrot.slane %v709, 2
    %v711 = vadd.f32 %v709, %v710
    %v712 = vrot.slane %v711, 1
    %v713 = vadd.f32 %v711, %v712
    %v714 = vsel %vm559, %v517, 0.0
    %v715 = vrot.slane %v714, 4
    %v716 = vadd.f32 %v714, %v715
    %v717 = vrot.slane %v716, 2
    %v718 = vadd.f32 %v716, %v717
    %v719 = vrot.slane %v718, 1
    %v720 = vadd.f32 %v718, %v719
    %v721 = vsel %vm559, %v518, 0.0
    %v722 = vrot.slane %v721, 4
    %v723 = vadd.f32 %v721, %v722
    %v724 = vrot.slane %v723, 2
    %v725 = vadd.f32 %v723, %v724
    %v726 = vrot.slane %v725, 1
    %v727 = vadd.f32 %v725, %v726
    %v728 = vsel %vm559, %v519, 0.0
    %v729 = vrot.slane %v728, 4
    %v730 = vadd.f32 %v728, %v729
    %v731 = vrot.slane %v730, 2
    %v732 = vadd.f32 %v730, %v731
    %v733 = vrot.slane %v732, 1
    %v734 = vadd.f32 %v732, %v733
    %v735 = vsel %vm559, %v520, 0.0
    %v736 = vrot.slane %v735, 4
    %v737 = vadd.f32 %v735, %v736
    %v738 = vrot.slane %v737, 2
    %v739 = vadd.f32 %v737, %v738
    %v740 = vrot.slane %v739, 1
    %v741 = vadd.f32 %v739, %v740
    %v742 = vsel %vm559, %v521, 0.0
    %v743 = vrot.slane %v742, 4
    %v744 = vadd.f32 %v742, %v743
    %v745 = vrot.slane %v744, 2
    %v746 = vadd.f32 %v744, %v745
    %v747 = vrot.slane %v746, 1
    %v748 = vadd.f32 %v746, %v747
    %v749 = vsel %vm559, %v522, 0.0
    %v750 = vrot.slane %v749, 4
    %v751 = vadd.f32 %v749, %v750
    %v752 = vrot.slane %v751, 2
    %v753 = vadd.f32 %v751, %v752
    %v754 = vrot.slane %v753, 1
    %v755 = vadd.f32 %v753, %v754
    %v756 = vsel %vm559, %v523, 0.0
    %v757 = vrot.slane %v756, 4
    %v758 = vadd.f32 %v756, %v757
    %v759 = vrot.slane %v758, 2
    %v760 = vadd.f32 %v758, %v759
    %v761 = vrot.slane %v760, 1
    %v762 = vadd.f32 %v760, %v761
    %v763 = vsel %vm559, %v524, 0.0
    %v764 = vrot.slane %v763, 4
    %v765 = vadd.f32 %v763, %v764
    %v766 = vrot.slane %v765, 2
    %v767 = vadd.f32 %v765, %v766
    %v768 = vrot.slane %v767, 1
    %v769 = vadd.f32 %v767, %v768
    %v770 = vsel %vm559, %v525, 0.0
    %v771 = vrot.slane %v770, 4
    %v772 = vadd.f32 %v770, %v771
    %v773 = vrot.slane %v772, 2
    %v774 = vadd.f32 %v772, %v773
    %v775 = vrot.slane %v774, 1
    %v776 = vadd.f32 %v774, %v775
    %v777 = vsel %vm559, %v526, 0.0
    %v778 = vrot.slane %v777, 4
    %v779 = vadd.f32 %v777, %v778
    %v780 = vrot.slane %v779, 2
    %v781 = vadd.f32 %v779, %v780
    %v782 = vrot.slane %v781, 1
    %v783 = vadd.f32 %v781, %v782
    %v784 = vsel %vm559, %v527, 0.0
    %v785 = vrot.slane %v784, 4
    %v786 = vadd.f32 %v784, %v785
    %v787 = vrot.slane %v786, 2
    %v788 = vadd.f32 %v786, %v787
    %v789 = vrot.slane %v788, 1
    %v790 = vadd.f32 %v788, %v789
    %v791 = vsel %vm559, %v528, 0.0
    %v792 = vrot.slane %v791, 4
    %v793 = vadd.f32 %v791, %v792
    %v794 = vrot.slane %v793, 2
    %v795 = vadd.f32 %v793, %v794
    %v796 = vrot.slane %v795, 1
    %v797 = vadd.f32 %v795, %v796
    %v798 = vsel %vm559, %v529, 0.0
    %v799 = vrot.slane %v798, 4
    %v800 = vadd.f32 %v798, %v799
    %v801 = vrot.slane %v800, 2
    %v802 = vadd.f32 %v800, %v801
    %v803 = vrot.slane %v802, 1
    %v804 = vadd.f32 %v802, %v803
    %v805 = vsel %vm559, %v530, 0.0
    %v806 = vrot.slane %v805, 4
    %v807 = vadd.f32 %v805, %v806
    %v808 = vrot.slane %v807, 2
    %v809 = vadd.f32 %v807, %v808
    %v810 = vrot.slane %v809, 1
    %v811 = vadd.f32 %v809, %v810
    %v812 = vsel %vm559, %v531, 0.0
    %v813 = vrot.slane %v812, 4
    %v814 = vadd.f32 %v812, %v813
    %v815 = vrot.slane %v814, 2
    %v816 = vadd.f32 %v814, %v815
    %v817 = vrot.slane %v816, 1
    %v818 = vadd.f32 %v816, %v817
    %v819 = vsel %vm559, %v532, 0.0
    %v820 = vrot.slane %v819, 4
    %v821 = vadd.f32 %v819, %v820
    %v822 = vrot.slane %v821, 2
    %v823 = vadd.f32 %v821, %v822
    %v824 = vrot.slane %v823, 1
    %v825 = vadd.f32 %v823, %v824
    %v826 = vsel %vm559, %v533, 0.0
    %v827 = vrot.slane %v826, 4
    %v828 = vadd.f32 %v826, %v827
    %v829 = vrot.slane %v828, 2
    %v830 = vadd.f32 %v828, %v829
    %v831 = vrot.slane %v830, 1
    %v832 = vadd.f32 %v830, %v831
    %v833 = vsel %vm559, %v534, 0.0
    %v834 = vrot.slane %v833, 4
    %v835 = vadd.f32 %v833, %v834
    %v836 = vrot.slane %v835, 2
    %v837 = vadd.f32 %v835, %v836
    %v838 = vrot.slane %v837, 1
    %v839 = vadd.f32 %v837, %v838
    %v840 = vsel %vm559, %v535, 0.0
    %v841 = vrot.slane %v840, 4
    %v842 = vadd.f32 %v840, %v841
    %v843 = vrot.slane %v842, 2
    %v844 = vadd.f32 %v842, %v843
    %v845 = vrot.slane %v844, 1
    %v846 = vadd.f32 %v844, %v845
    %v847 = vsel %vm559, %v536, 0.0
    %v848 = vrot.slane %v847, 4
    %v849 = vadd.f32 %v847, %v848
    %v850 = vrot.slane %v849, 2
    %v851 = vadd.f32 %v849, %v850
    %v852 = vrot.slane %v851, 1
    %v853 = vadd.f32 %v851, %v852
    %v854 = vsel %vm559, %v537, 0.0
    %v855 = vrot.slane %v854, 4
    %v856 = vadd.f32 %v854, %v855
    %v857 = vrot.slane %v856, 2
    %v858 = vadd.f32 %v856, %v857
    %v859 = vrot.slane %v858, 1
    %v860 = vadd.f32 %v858, %v859
    %v861 = vsel %vm559, %v538, 0.0
    %v862 = vrot.slane %v861, 4
    %v863 = vadd.f32 %v861, %v862
    %v864 = vrot.slane %v863, 2
    %v865 = vadd.f32 %v863, %v864
    %v866 = vrot.slane %v865, 1
    %v867 = vadd.f32 %v865, %v866
    %v868 = vsel %vm559, %v539, 0.0
    %v869 = vrot.slane %v868, 4
    %v870 = vadd.f32 %v868, %v869
    %v871 = vrot.slane %v870, 2
    %v872 = vadd.f32 %v870, %v871
    %v873 = vrot.slane %v872, 1
    %v874 = vadd.f32 %v872, %v873
    %v875 = vsel %vm559, %v540, 0.0
    %v876 = vrot.slane %v875, 4
    %v877 = vadd.f32 %v875, %v876
    %v878 = vrot.slane %v877, 2
    %v879 = vadd.f32 %v877, %v878
    %v880 = vrot.slane %v879, 1
    %v881 = vadd.f32 %v879, %v880
    %v882 = vsel %vm559, %v541, 0.0
    %v883 = vrot.slane %v882, 4
    %v884 = vadd.f32 %v882, %v883
    %v885 = vrot.slane %v884, 2
    %v886 = vadd.f32 %v884, %v885
    %v887 = vrot.slane %v886, 1
    %v888 = vadd.f32 %v886, %v887
    %v889 = vsel %vm559, %v542, 0.0
    %v890 = vrot.slane %v889, 4
    %v891 = vadd.f32 %v889, %v890
    %v892 = vrot.slane %v891, 2
    %v893 = vadd.f32 %v891, %v892
    %v894 = vrot.slane %v893, 1
    %v895 = vadd.f32 %v893, %v894
    %v896 = vsel %vm559, %v543, 0.0
    %v897 = vrot.slane %v896, 4
    %v898 = vadd.f32 %v896, %v897
    %v899 = vrot.slane %v898, 2
    %v900 = vadd.f32 %v898, %v899
    %v901 = vrot.slane %v900, 1
    %v902 = vadd.f32 %v900, %v901
    %v903 = vsel %vm559, %v544, 0.0
    %v904 = vrot.slane %v903, 4
    %v905 = vadd.f32 %v903, %v904
    %v906 = vrot.slane %v905, 2
    %v907 = vadd.f32 %v905, %v906
    %v908 = vrot.slane %v907, 1
    %v909 = vadd.f32 %v907, %v908
    %v910 = vsel %vm559, %v545, 0.0
    %v911 = vrot.slane %v910, 4
    %v912 = vadd.f32 %v910, %v911
    %v913 = vrot.slane %v912, 2
    %v914 = vadd.f32 %v912, %v913
    %v915 = vrot.slane %v914, 1
    %v916 = vadd.f32 %v914, %v915
    %v917 = vsel %vm559, %v546, 0.0
    %v918 = vrot.slane %v917, 4
    %v919 = vadd.f32 %v917, %v918
    %v920 = vrot.slane %v919, 2
    %v921 = vadd.f32 %v919, %v920
    %v922 = vrot.slane %v921, 1
    %v923 = vadd.f32 %v921, %v922
    %v924 = vsel %vm559, %v547, 0.0
    %v925 = vrot.slane %v924, 4
    %v926 = vadd.f32 %v924, %v925
    %v927 = vrot.slane %v926, 2
    %v928 = vadd.f32 %v926, %v927
    %v929 = vrot.slane %v928, 1
    %v930 = vadd.f32 %v928, %v929
    %v931 = vsel %vm559, %v548, 0.0
    %v932 = vrot.slane %v931, 4
    %v933 = vadd.f32 %v931, %v932
    %v934 = vrot.slane %v933, 2
    %v935 = vadd.f32 %v933, %v934
    %v936 = vrot.slane %v935, 1
    %v937 = vadd.f32 %v935, %v936
    %v938 = vsel %vm559, %v549, 0.0
    %v939 = vrot.slane %v938, 4
    %v940 = vadd.f32 %v938, %v939
    %v941 = vrot.slane %v940, 2
    %v942 = vadd.f32 %v940, %v941
    %v943 = vrot.slane %v942, 1
    %v944 = vadd.f32 %v942, %v943
    %v945 = vsel %vm559, %v550, 0.0
    %v946 = vrot.slane %v945, 4
    %v947 = vadd.f32 %v945, %v946
    %v948 = vrot.slane %v947, 2
    %v949 = vadd.f32 %v947, %v948
    %v950 = vrot.slane %v949, 1
    %v951 = vadd.f32 %v949, %v950
    %v952 = vsel %vm559, %v551, 0.0
    %v953 = vrot.slane %v952, 4
    %v954 = vadd.f32 %v952, %v953
    %v955 = vrot.slane %v954, 2
    %v956 = vadd.f32 %v954, %v955
    %v957 = vrot.slane %v956, 1
    %v958 = vadd.f32 %v956, %v957
    %v959 = vsel %vm559, %v552, 0.0
    %v960 = vrot.slane %v959, 4
    %v961 = vadd.f32 %v959, %v960
    %v962 = vrot.slane %v961, 2
    %v963 = vadd.f32 %v961, %v962
    %v964 = vrot.slane %v963, 1
    %v965 = vadd.f32 %v963, %v964
    %v966 = vsel %vm559, %v553, 0.0
    %v967 = vrot.slane %v966, 4
    %v968 = vadd.f32 %v966, %v967
    %v969 = vrot.slane %v968, 2
    %v970 = vadd.f32 %v968, %v969
    %v971 = vrot.slane %v970, 1
    %v972 = vadd.f32 %v970, %v971
    %v973 = vsel %vm559, %v554, 0.0
    %v974 = vrot.slane %v973, 4
    %v975 = vadd.f32 %v973, %v974
    %v976 = vrot.slane %v975, 2
    %v977 = vadd.f32 %v975, %v976
    %v978 = vrot.slane %v977, 1
    %v979 = vadd.f32 %v977, %v978
    %v980 = vsel %vm559, %v555, 0.0
    %v981 = vrot.slane %v980, 4
    %v982 = vadd.f32 %v980, %v981
    %v983 = vrot.slane %v982, 2
    %v984 = vadd.f32 %v982, %v983
    %v985 = vrot.slane %v984, 1
    %v986 = vadd.f32 %v984, %v985
    %v987 = vsel %vm559, %v556, 0.0
    %v988 = vrot.slane %v987, 4
    %v989 = vadd.f32 %v987, %v988
    %v990 = vrot.slane %v989, 2
    %v991 = vadd.f32 %v989, %v990
    %v992 = vrot.slane %v991, 1
    %v993 = vadd.f32 %v991, %v992
    %v994 = vsel %vm559, %v557, 0.0
    %v995 = vrot.slane %v994, 4
    %v996 = vadd.f32 %v994, %v995
    %v997 = vrot.slane %v996, 2
    %v998 = vadd.f32 %v996, %v997
    %v999 = vrot.slane %v998, 1
    %v1000 = vadd.f32 %v998, %v999
    %v1001 = vsel %vm559, %v558, 0.0
    %v1002 = vrot.slane %v1001, 4
    %v1003 = vadd.f32 %v1001, %v1002
    %v1004 = vrot.slane %v1003, 2
    %v1005 = vadd.f32 %v1003, %v1004
    %v1006 = vrot.slane %v1005, 1
    %v1007 = vadd.f32 %v1005, %v1006
    %v1008 = vpack.c.bf16 %v566, %v566
    %v1009 = vpack.c.bf16 %v573, %v573
    %v1010 = vpack.c.bf16 %v580, %v580
    %v1011 = vpack.c.bf16 %v587, %v587
    %v1012 = vpack.c.bf16 %v594, %v594
    %v1013 = vpack.c.bf16 %v601, %v601
    %v1014 = vpack.c.bf16 %v608, %v608
    %v1015 = vpack.c.bf16 %v615, %v615
    %v1016 = vpack.c.bf16 %v622, %v622
    %v1017 = vpack.c.bf16 %v629, %v629
    %v1018 = vpack.c.bf16 %v636, %v636
    %v1019 = vpack.c.bf16 %v643, %v643
    %v1020 = vpack.c.bf16 %v650, %v650
    %v1021 = vpack.c.bf16 %v657, %v657
    %v1022 = vpack.c.bf16 %v664, %v664
    %v1023 = vpack.c.bf16 %v671, %v671
    %v1024 = vpack.c.bf16 %v678, %v678
    %v1025 = vpack.c.bf16 %v685, %v685
    %v1026 = vpack.c.bf16 %v692, %v692
    %v1027 = vpack.c.bf16 %v699, %v699
    %v1028 = vpack.c.bf16 %v706, %v706
    %v1029 = vpack.c.bf16 %v713, %v713
    %v1030 = vpack.c.bf16 %v720, %v720
    %v1031 = vpack.c.bf16 %v727, %v727
    %v1032 = vpack.c.bf16 %v734, %v734
    %v1033 = vpack.c.bf16 %v741, %v741
    %v1034 = vpack.c.bf16 %v748, %v748
    %v1035 = vpack.c.bf16 %v755, %v755
    %v1036 = vpack.c.bf16 %v762, %v762
    %v1037 = vpack.c.bf16 %v769, %v769
    %v1038 = vpack.c.bf16 %v776, %v776
    %v1039 = vpack.c.bf16 %v783, %v783
    %v1040 = vpack.c.bf16 %v790, %v790
    %v1041 = vpack.c.bf16 %v797, %v797
    %v1042 = vpack.c.bf16 %v804, %v804
    %v1043 = vpack.c.bf16 %v811, %v811
    %v1044 = vpack.c.bf16 %v818, %v818
    %v1045 = vpack.c.bf16 %v825, %v825
    %v1046 = vpack.c.bf16 %v832, %v832
    %v1047 = vpack.c.bf16 %v839, %v839
    %v1048 = vpack.c.bf16 %v846, %v846
    %v1049 = vpack.c.bf16 %v853, %v853
    %v1050 = vpack.c.bf16 %v860, %v860
    %v1051 = vpack.c.bf16 %v867, %v867
    %v1052 = vpack.c.bf16 %v874, %v874
    %v1053 = vpack.c.bf16 %v881, %v881
    %v1054 = vpack.c.bf16 %v888, %v888
    %v1055 = vpack.c.bf16 %v895, %v895
    %v1056 = vpack.c.bf16 %v902, %v902
    %v1057 = vpack.c.bf16 %v909, %v909
    %v1058 = vpack.c.bf16 %v916, %v916
    %v1059 = vpack.c.bf16 %v923, %v923
    %v1060 = vpack.c.bf16 %v930, %v930
    %v1061 = vpack.c.bf16 %v937, %v937
    %v1062 = vpack.c.bf16 %v944, %v944
    %v1063 = vpack.c.bf16 %v951, %v951
    %v1064 = vpack.c.bf16 %v958, %v958
    %v1065 = vpack.c.bf16 %v965, %v965
    %v1066 = vpack.c.bf16 %v972, %v972
    %v1067 = vpack.c.bf16 %v979, %v979
    %v1068 = vpack.c.bf16 %v986, %v986
    %v1069 = vpack.c.bf16 %v993, %v993
    %v1070 = vpack.c.bf16 %v1000, %v1000
    %v1071 = vpack.c.bf16 %v1007, %v1007
    %v1072 = vld [vmem:[#allocation2] sm:$0xff]
    %v1073 = vld [vmem:[#allocation2 + $0x8] sm:$0xff]
    %v1074 = vld [vmem:[#allocation2 + $0x10] sm:$0xff]
    %v1075 = vld [vmem:[#allocation2 + $0x18] sm:$0xff]
    %v1076 = vld [vmem:[#allocation2 + $0x20] sm:$0xff]
    %v1077 = vld [vmem:[#allocation2 + $0x28] sm:$0xff]
    %v1078 = vld [vmem:[#allocation2 + $0x30] sm:$0xff]
    %v1079 = vld [vmem:[#allocation2 + $0x38] sm:$0xff]
    %v1080 = vld [vmem:[#allocation2 + $0x40] sm:$0xff]
    %v1081 = vld [vmem:[#allocation2 + $0x48] sm:$0xff]
    %v1082 = vld [vmem:[#allocation2 + $0x50] sm:$0xff]
    %v1083 = vld [vmem:[#allocation2 + $0x58] sm:$0xff]
    %v1084 = vld [vmem:[#allocation2 + $0x60] sm:$0xff]
    %v1085 = vld [vmem:[#allocation2 + $0x68] sm:$0xff]
    %v1086 = vld [vmem:[#allocation2 + $0x70] sm:$0xff]
    %v1087 = vld [vmem:[#allocation2 + $0x78] sm:$0xff]
    %v1088 = vld [vmem:[#allocation2 + $0x80] sm:$0xff]
    %v1089 = vld [vmem:[#allocation2 + $0x88] sm:$0xff]
    %v1090 = vld [vmem:[#allocation2 + $0x90] sm:$0xff]
    %v1091 = vld [vmem:[#allocation2 + $0x98] sm:$0xff]
    %v1092 = vld [vmem:[#allocation2 + $0xa0] sm:$0xff]
    %v1093 = vld [vmem:[#allocation2 + $0xa8] sm:$0xff]
    %v1094 = vld [vmem:[#allocation2 + $0xb0] sm:$0xff]
    %v1095 = vld [vmem:[#allocation2 + $0xb8] sm:$0xff]
    %v1096 = vld [vmem:[#allocation2 + $0xc0] sm:$0xff]
    %v1097 = vld [vmem:[#allocation2 + $0xc8] sm:$0xff]
    %v1098 = vld [vmem:[#allocation2 + $0xd0] sm:$0xff]
    %v1099 = vld [vmem:[#allocation2 + $0xd8] sm:$0xff]
    %v1100 = vld [vmem:[#allocation2 + $0xe0] sm:$0xff]
    %v1101 = vld [vmem:[#allocation2 + $0xe8] sm:$0xff]
    %v1102 = vld [vmem:[#allocation2 + $0xf0] sm:$0xff]
    %v1103 = vld [vmem:[#allocation2 + $0xf8] sm:$0xff]
    %v1104 = vld [vmem:[#allocation2 + $0x100] sm:$0xff]
    %v1105 = vld [vmem:[#allocation2 + $0x108] sm:$0xff]
    %v1106 = vld [vmem:[#allocation2 + $0x110] sm:$0xff]
    %v1107 = vld [vmem:[#allocation2 + $0x118] sm:$0xff]
    %v1108 = vld [vmem:[#allocation2 + $0x120] sm:$0xff]
    %v1109 = vld [vmem:[#allocation2 + $0x128] sm:$0xff]
    %v1110 = vld [vmem:[#allocation2 + $0x130] sm:$0xff]
    %v1111 = vld [vmem:[#allocation2 + $0x138] sm:$0xff]
    %v1112 = vld [vmem:[#allocation2 + $0x140] sm:$0xff]
    %v1113 = vld [vmem:[#allocation2 + $0x148] sm:$0xff]
    %v1114 = vld [vmem:[#allocation2 + $0x150] sm:$0xff]
    %v1115 = vld [vmem:[#allocation2 + $0x158] sm:$0xff]
    %v1116 = vld [vmem:[#allocation2 + $0x160] sm:$0xff]
    %v1117 = vld [vmem:[#allocation2 + $0x168] sm:$0xff]
    %v1118 = vld [vmem:[#allocation2 + $0x170] sm:$0xff]
    %v1119 = vld [vmem:[#allocation2 + $0x178] sm:$0xff]
    %v1120 = vld [vmem:[#allocation2 + $0x180] sm:$0xff]
    %v1121 = vld [vmem:[#allocation2 + $0x188] sm:$0xff]
    %v1122 = vld [vmem:[#allocation2 + $0x190] sm:$0xff]
    %v1123 = vld [vmem:[#allocation2 + $0x198] sm:$0xff]
    %v1124 = vld [vmem:[#allocation2 + $0x1a0] sm:$0xff]
    %v1125 = vld [vmem:[#allocation2 + $0x1a8] sm:$0xff]
    %v1126 = vld [vmem:[#allocation2 + $0x1b0] sm:$0xff]
    %v1127 = vld [vmem:[#allocation2 + $0x1b8] sm:$0xff]
    %v1128 = vld [vmem:[#allocation2 + $0x1c0] sm:$0xff]
    %v1129 = vld [vmem:[#allocation2 + $0x1c8] sm:$0xff]
    %v1130 = vld [vmem:[#allocation2 + $0x1d0] sm:$0xff]
    %v1131 = vld [vmem:[#allocation2 + $0x1d8] sm:$0xff]
    %v1132 = vld [vmem:[#allocation2 + $0x1e0] sm:$0xff]
    %v1133 = vld [vmem:[#allocation2 + $0x1e8] sm:$0xff]
    %v1134 = vld [vmem:[#allocation2 + $0x1f0] sm:$0xff]
    %v1135 = vld [vmem:[#allocation2 + $0x1f8] sm:$0xff]
    %v1136 = vld [vmem:[#allocation2 + $0x200] sm:$0xff]
    %v1137 = vld [vmem:[#allocation2 + $0x208] sm:$0xff]
    %v1138 = vld [vmem:[#allocation2 + $0x210] sm:$0xff]
    %v1139 = vld [vmem:[#allocation2 + $0x218] sm:$0xff]
    %v1140 = vld [vmem:[#allocation2 + $0x220] sm:$0xff]
    %v1141 = vld [vmem:[#allocation2 + $0x228] sm:$0xff]
    %v1142 = vld [vmem:[#allocation2 + $0x230] sm:$0xff]
    %v1143 = vld [vmem:[#allocation2 + $0x238] sm:$0xff]
    %v1144 = vld [vmem:[#allocation2 + $0x240] sm:$0xff]
    %v1145 = vld [vmem:[#allocation2 + $0x248] sm:$0xff]
    %v1146 = vld [vmem:[#allocation2 + $0x250] sm:$0xff]
    %v1147 = vld [vmem:[#allocation2 + $0x258] sm:$0xff]
    %v1148 = vld [vmem:[#allocation2 + $0x260] sm:$0xff]
    %v1149 = vld [vmem:[#allocation2 + $0x268] sm:$0xff]
    %v1150 = vld [vmem:[#allocation2 + $0x270] sm:$0xff]
    %v1151 = vld [vmem:[#allocation2 + $0x278] sm:$0xff]
    %v1152 = vld [vmem:[#allocation2 + $0x280] sm:$0xff]
    %v1153 = vld [vmem:[#allocation2 + $0x288] sm:$0xff]
    %v1154 = vld [vmem:[#allocation2 + $0x290] sm:$0xff]
    %v1155 = vld [vmem:[#allocation2 + $0x298] sm:$0xff]
    %v1156 = vld [vmem:[#allocation2 + $0x2a0] sm:$0xff]
    %v1157 = vld [vmem:[#allocation2 + $0x2a8] sm:$0xff]
    %v1158 = vld [vmem:[#allocation2 + $0x2b0] sm:$0xff]
    %v1159 = vld [vmem:[#allocation2 + $0x2b8] sm:$0xff]
    %v1160 = vld [vmem:[#allocation2 + $0x2c0] sm:$0xff]
    %v1161 = vld [vmem:[#allocation2 + $0x2c8] sm:$0xff]
    %v1162 = vld [vmem:[#allocation2 + $0x2d0] sm:$0xff]
    %v1163 = vld [vmem:[#allocation2 + $0x2d8] sm:$0xff]
    %v1164 = vld [vmem:[#allocation2 + $0x2e0] sm:$0xff]
    %v1165 = vld [vmem:[#allocation2 + $0x2e8] sm:$0xff]
    %v1166 = vld [vmem:[#allocation2 + $0x2f0] sm:$0xff]
    %v1167 = vld [vmem:[#allocation2 + $0x2f8] sm:$0xff]
    %v1168 = vld [vmem:[#allocation2 + $0x300] sm:$0xff]
    %v1169 = vld [vmem:[#allocation2 + $0x308] sm:$0xff]
    %v1170 = vld [vmem:[#allocation2 + $0x310] sm:$0xff]
    %v1171 = vld [vmem:[#allocation2 + $0x318] sm:$0xff]
    %v1172 = vld [vmem:[#allocation2 + $0x320] sm:$0xff]
    %v1173 = vld [vmem:[#allocation2 + $0x328] sm:$0xff]
    %v1174 = vld [vmem:[#allocation2 + $0x330] sm:$0xff]
    %v1175 = vld [vmem:[#allocation2 + $0x338] sm:$0xff]
    %v1176 = vld [vmem:[#allocation2 + $0x340] sm:$0xff]
    %v1177 = vld [vmem:[#allocation2 + $0x348] sm:$0xff]
    %v1178 = vld [vmem:[#allocation2 + $0x350] sm:$0xff]
    %v1179 = vld [vmem:[#allocation2 + $0x358] sm:$0xff]
    %v1180 = vld [vmem:[#allocation2 + $0x360] sm:$0xff]
    %v1181 = vld [vmem:[#allocation2 + $0x368] sm:$0xff]
    %v1182 = vld [vmem:[#allocation2 + $0x370] sm:$0xff]
    %v1183 = vld [vmem:[#allocation2 + $0x378] sm:$0xff]
    %v1184 = vld [vmem:[#allocation2 + $0x380] sm:$0xff]
    %v1185 = vld [vmem:[#allocation2 + $0x388] sm:$0xff]
    %v1186 = vld [vmem:[#allocation2 + $0x390] sm:$0xff]
    %v1187 = vld [vmem:[#allocation2 + $0x398] sm:$0xff]
    %v1188 = vld [vmem:[#allocation2 + $0x3a0] sm:$0xff]
    %v1189 = vld [vmem:[#allocation2 + $0x3a8] sm:$0xff]
    %v1190 = vld [vmem:[#allocation2 + $0x3b0] sm:$0xff]
    %v1191 = vld [vmem:[#allocation2 + $0x3b8] sm:$0xff]
    %v1192 = vld [vmem:[#allocation2 + $0x3c0] sm:$0xff]
    %v1193 = vld [vmem:[#allocation2 + $0x3c8] sm:$0xff]
    %v1194 = vld [vmem:[#allocation2 + $0x3d0] sm:$0xff]
    %v1195 = vld [vmem:[#allocation2 + $0x3d8] sm:$0xff]
    %v1196 = vld [vmem:[#allocation2 + $0x3e0] sm:$0xff]
    %v1197 = vld [vmem:[#allocation2 + $0x3e8] sm:$0xff]
    %v1198 = vld [vmem:[#allocation2 + $0x3f0] sm:$0xff]
    %v1199 = vld [vmem:[#allocation2 + $0x3f8] sm:$0xff]
    %v1200 = vld [vmem:[#allocation2 + $0x400] sm:$0xff]
    %v1201 = vld [vmem:[#allocation2 + $0x408] sm:$0xff]
    %v1202 = vld [vmem:[#allocation2 + $0x410] sm:$0xff]
    %v1203 = vld [vmem:[#allocation2 + $0x418] sm:$0xff]
    %v1204 = vld [vmem:[#allocation2 + $0x420] sm:$0xff]
    %v1205 = vld [vmem:[#allocation2 + $0x428] sm:$0xff]
    %v1206 = vld [vmem:[#allocation2 + $0x430] sm:$0xff]
    %v1207 = vld [vmem:[#allocation2 + $0x438] sm:$0xff]
    %v1208 = vld [vmem:[#allocation2 + $0x440] sm:$0xff]
    %v1209 = vld [vmem:[#allocation2 + $0x448] sm:$0xff]
    %v1210 = vld [vmem:[#allocation2 + $0x450] sm:$0xff]
    %v1211 = vld [vmem:[#allocation2 + $0x458] sm:$0xff]
    %v1212 = vld [vmem:[#allocation2 + $0x460] sm:$0xff]
    %v1213 = vld [vmem:[#allocation2 + $0x468] sm:$0xff]
    %v1214 = vld [vmem:[#allocation2 + $0x470] sm:$0xff]
    %v1215 = vld [vmem:[#allocation2 + $0x478] sm:$0xff]
    %v1216 = vld [vmem:[#allocation2 + $0x480] sm:$0xff]
    %v1217 = vld [vmem:[#allocation2 + $0x488] sm:$0xff]
    %v1218 = vld [vmem:[#allocation2 + $0x490] sm:$0xff]
    %v1219 = vld [vmem:[#allocation2 + $0x498] sm:$0xff]
    %v1220 = vld [vmem:[#allocation2 + $0x4a0] sm:$0xff]
    %v1221 = vld [vmem:[#allocation2 + $0x4a8] sm:$0xff]
    %v1222 = vld [vmem:[#allocation2 + $0x4b0] sm:$0xff]
    %v1223 = vld [vmem:[#allocation2 + $0x4b8] sm:$0xff]
    %v1224 = vld [vmem:[#allocation2 + $0x4c0] sm:$0xff]
    %v1225 = vld [vmem:[#allocation2 + $0x4c8] sm:$0xff]
    %v1226 = vld [vmem:[#allocation2 + $0x4d0] sm:$0xff]
    %v1227 = vld [vmem:[#allocation2 + $0x4d8] sm:$0xff]
    %v1228 = vld [vmem:[#allocation2 + $0x4e0] sm:$0xff]
    %v1229 = vld [vmem:[#allocation2 + $0x4e8] sm:$0xff]
    %v1230 = vld [vmem:[#allocation2 + $0x4f0] sm:$0xff]
    %v1231 = vld [vmem:[#allocation2 + $0x4f8] sm:$0xff]
    %v1232 = vld [vmem:[#allocation2 + $0x500] sm:$0xff]
    %v1233 = vld [vmem:[#allocation2 + $0x508] sm:$0xff]
    %v1234 = vld [vmem:[#allocation2 + $0x510] sm:$0xff]
    %v1235 = vld [vmem:[#allocation2 + $0x518] sm:$0xff]
    %v1236 = vld [vmem:[#allocation2 + $0x520] sm:$0xff]
    %v1237 = vld [vmem:[#allocation2 + $0x528] sm:$0xff]
    %v1238 = vld [vmem:[#allocation2 + $0x530] sm:$0xff]
    %v1239 = vld [vmem:[#allocation2 + $0x538] sm:$0xff]
    %v1240 = vld [vmem:[#allocation2 + $0x540] sm:$0xff]
    %v1241 = vld [vmem:[#allocation2 + $0x548] sm:$0xff]
    %v1242 = vld [vmem:[#allocation2 + $0x550] sm:$0xff]
    %v1243 = vld [vmem:[#allocation2 + $0x558] sm:$0xff]
    %v1244 = vld [vmem:[#allocation2 + $0x560] sm:$0xff]
    %v1245 = vld [vmem:[#allocation2 + $0x568] sm:$0xff]
    %v1246 = vld [vmem:[#allocation2 + $0x570] sm:$0xff]
    %v1247 = vld [vmem:[#allocation2 + $0x578] sm:$0xff]
    %v1248 = vld [vmem:[#allocation2 + $0x580] sm:$0xff]
    %v1249 = vld [vmem:[#allocation2 + $0x588] sm:$0xff]
    %v1250 = vld [vmem:[#allocation2 + $0x590] sm:$0xff]
    %v1251 = vld [vmem:[#allocation2 + $0x598] sm:$0xff]
    %v1252 = vld [vmem:[#allocation2 + $0x5a0] sm:$0xff]
    %v1253 = vld [vmem:[#allocation2 + $0x5a8] sm:$0xff]
    %v1254 = vld [vmem:[#allocation2 + $0x5b0] sm:$0xff]
    %v1255 = vld [vmem:[#allocation2 + $0x5b8] sm:$0xff]
    %v1256 = vld [vmem:[#allocation2 + $0x5c0] sm:$0xff]
    %v1257 = vld [vmem:[#allocation2 + $0x5c8] sm:$0xff]
    %v1258 = vld [vmem:[#allocation2 + $0x5d0] sm:$0xff]
    %v1259 = vld [vmem:[#allocation2 + $0x5d8] sm:$0xff]
    %v1260 = vld [vmem:[#allocation2 + $0x5e0] sm:$0xff]
    %v1261 = vld [vmem:[#allocation2 + $0x5e8] sm:$0xff]
    %v1262 = vld [vmem:[#allocation2 + $0x5f0] sm:$0xff]
    %v1263 = vld [vmem:[#allocation2 + $0x5f8] sm:$0xff]
    %v1328 = vunpack.c.l.b16 %v1008
    %v1329 = vunpack.c.l.b16 %v1009
    %v1330 = vunpack.c.l.b16 %v1010
    %v1331 = vunpack.c.l.b16 %v1011
    %v1332 = vunpack.c.l.b16 %v1012
    %v1333 = vunpack.c.l.b16 %v1013
    %v1334 = vunpack.c.l.b16 %v1014
    %v1335 = vunpack.c.l.b16 %v1015
    %v1336 = vunpack.c.l.b16 %v1016
    %v1337 = vunpack.c.l.b16 %v1017
    %v1338 = vunpack.c.l.b16 %v1018
    %v1339 = vunpack.c.l.b16 %v1019
    %v1340 = vunpack.c.l.b16 %v1020
    %v1341 = vunpack.c.l.b16 %v1021
    %v1342 = vunpack.c.l.b16 %v1022
    %v1343 = vunpack.c.l.b16 %v1023
    %v1344 = vunpack.c.l.b16 %v1024
    %v1345 = vunpack.c.l.b16 %v1025
    %v1346 = vunpack.c.l.b16 %v1026
    %v1347 = vunpack.c.l.b16 %v1027
    %v1348 = vunpack.c.l.b16 %v1028
    %v1349 = vunpack.c.l.b16 %v1029
    %v1350 = vunpack.c.l.b16 %v1030
    %v1351 = vunpack.c.l.b16 %v1031
    %v1352 = vunpack.c.l.b16 %v1032
    %v1353 = vunpack.c.l.b16 %v1033
    %v1354 = vunpack.c.l.b16 %v1034
    %v1355 = vunpack.c.l.b16 %v1035
    %v1356 = vunpack.c.l.b16 %v1036
    %v1357 = vunpack.c.l.b16 %v1037
    %v1358 = vunpack.c.l.b16 %v1038
    %v1359 = vunpack.c.l.b16 %v1039
    %v1360 = vunpack.c.l.b16 %v1040
    %v1361 = vunpack.c.l.b16 %v1041
    %v1362 = vunpack.c.l.b16 %v1042
    %v1363 = vunpack.c.l.b16 %v1043
    %v1364 = vunpack.c.l.b16 %v1044
    %v1365 = vunpack.c.l.b16 %v1045
    %v1366 = vunpack.c.l.b16 %v1046
    %v1367 = vunpack.c.l.b16 %v1047
    %v1368 = vunpack.c.l.b16 %v1048
    %v1369 = vunpack.c.l.b16 %v1049
    %v1370 = vunpack.c.l.b16 %v1050
    %v1371 = vunpack.c.l.b16 %v1051
    %v1372 = vunpack.c.l.b16 %v1052
    %v1373 = vunpack.c.l.b16 %v1053
    %v1374 = vunpack.c.l.b16 %v1054
    %v1375 = vunpack.c.l.b16 %v1055
    %v1376 = vunpack.c.l.b16 %v1056
    %v1377 = vunpack.c.l.b16 %v1057
    %v1378 = vunpack.c.l.b16 %v1058
    %v1379 = vunpack.c.l.b16 %v1059
    %v1380 = vunpack.c.l.b16 %v1060
    %v1381 = vunpack.c.l.b16 %v1061
    %v1382 = vunpack.c.l.b16 %v1062
    %v1383 = vunpack.c.l.b16 %v1063
    %v1384 = vunpack.c.l.b16 %v1064
    %v1385 = vunpack.c.l.b16 %v1065
    %v1386 = vunpack.c.l.b16 %v1066
    %v1387 = vunpack.c.l.b16 %v1067
    %v1388 = vunpack.c.l.b16 %v1068
    %v1389 = vunpack.c.l.b16 %v1069
    %v1390 = vunpack.c.l.b16 %v1070
    %v1391 = vunpack.c.l.b16 %v1071
    %vm1392 = vcmask 1041409
    %v1393 = vsel %vm1392, %v1332, %v1328
    %vm1394 = vcmask 1042434
    %v1395 = vsel %vm1394, %v1336, %v1393
    %vm1396 = vcmask 1043459
    %v1397 = vsel %vm1396, %v1340, %v1395
    %vm1398 = vcmask 1044484
    %v1399 = vsel %vm1398, %v1344, %v1397
    %vm1400 = vcmask 1045509
    %v1401 = vsel %vm1400, %v1348, %v1399
    %vm1402 = vcmask 1046534
    %v1403 = vsel %vm1402, %v1352, %v1401
    %vm1404 = vcmask 1047559
    %v1405 = vsel %vm1404, %v1356, %v1403
    %v1406 = vsel %vm1392, %v1333, %v1329
    %v1407 = vsel %vm1394, %v1337, %v1406
    %v1408 = vsel %vm1396, %v1341, %v1407
    %v1409 = vsel %vm1398, %v1345, %v1408
    %v1410 = vsel %vm1400, %v1349, %v1409
    %v1411 = vsel %vm1402, %v1353, %v1410
    %v1412 = vsel %vm1404, %v1357, %v1411
    %v1413 = vsel %vm1392, %v1334, %v1330
    %v1414 = vsel %vm1394, %v1338, %v1413
    %v1415 = vsel %vm1396, %v1342, %v1414
    %v1416 = vsel %vm1398, %v1346, %v1415
    %v1417 = vsel %vm1400, %v1350, %v1416
    %v1418 = vsel %vm1402, %v1354, %v1417
    %v1419 = vsel %vm1404, %v1358, %v1418
    %v1420 = vsel %vm1392, %v1335, %v1331
    %v1421 = vsel %vm1394, %v1339, %v1420
    %v1422 = vsel %vm1396, %v1343, %v1421
    %v1423 = vsel %vm1398, %v1347, %v1422
    %v1424 = vsel %vm1400, %v1351, %v1423
    %v1425 = vsel %vm1402, %v1355, %v1424
    %v1426 = vsel %vm1404, %v1359, %v1425
    %v1427 = vsel %vm1392, %v1364, %v1360
    %v1428 = vsel %vm1394, %v1368, %v1427
    %v1429 = vsel %vm1396, %v1372, %v1428
    %v1430 = vsel %vm1398, %v1376, %v1429
    %v1431 = vsel %vm1400, %v1380, %v1430
    %v1432 = vsel %vm1402, %v1384, %v1431
    %v1433 = vsel %vm1404, %v1388, %v1432
    %v1434 = vsel %vm1392, %v1365, %v1361
    %v1435 = vsel %vm1394, %v1369, %v1434
    %v1436 = vsel %vm1396, %v1373, %v1435
    %v1437 = vsel %vm1398, %v1377, %v1436
    %v1438 = vsel %vm1400, %v1381, %v1437
    %v1439 = vsel %vm1402, %v1385, %v1438
    %v1440 = vsel %vm1404, %v1389, %v1439
    %v1441 = vsel %vm1392, %v1366, %v1362
    %v1442 = vsel %vm1394, %v1370, %v1441
    %v1443 = vsel %vm1396, %v1374, %v1442
    %v1444 = vsel %vm1398, %v1378, %v1443
    %v1445 = vsel %vm1400, %v1382, %v1444
    %v1446 = vsel %vm1402, %v1386, %v1445
    %v1447 = vsel %vm1404, %v1390, %v1446
    %v1448 = vsel %vm1392, %v1367, %v1363
    %v1449 = vsel %vm1394, %v1371, %v1448
    %v1450 = vsel %vm1396, %v1375, %v1449
    %v1451 = vsel %vm1398, %v1379, %v1450
    %v1452 = vsel %vm1400, %v1383, %v1451
    %v1453 = vsel %vm1402, %v1387, %v1452
    %v1454 = vsel %vm1404, %v1391, %v1453
    %v1455 = vpack.c.b16 %v1433, %v1405
    %v1456 = vpack.c.b16 %v1440, %v1412
    %v1457 = vpack.c.b16 %v1447, %v1419
    %v1458 = vpack.c.b16 %v1454, %v1426
    %v1655 = vunpack.c.l.b16 %v1072
    %v1656 = vunpack.c.h.b16 %v1072
    %v1657 = vunpack.c.l.b16 %v1073
    %v1658 = vunpack.c.h.b16 %v1073
    %v1659 = vunpack.c.l.b16 %v1074
    %v1660 = vunpack.c.h.b16 %v1074
    %v1661 = vunpack.c.l.b16 %v1075
    %v1662 = vunpack.c.h.b16 %v1075
    %v1663 = vunpack.c.l.b16 %v1076
    %v1664 = vunpack.c.h.b16 %v1076
    %v1665 = vunpack.c.l.b16 %v1077
    %v1666 = vunpack.c.h.b16 %v1077
    %v1667 = vunpack.c.l.b16 %v1078
    %v1668 = vunpack.c.h.b16 %v1078
    %v1669 = vunpack.c.l.b16 %v1079
    %v1670 = vunpack.c.h.b16 %v1079
    %v1671 = vunpack.c.l.b16 %v1080
    %v1672 = vunpack.c.h.b16 %v1080
    %v1673 = vunpack.c.l.b16 %v1081
    %v1674 = vunpack.c.h.b16 %v1081
    %v1675 = vunpack.c.l.b16 %v1082
    %v1676 = vunpack.c.h.b16 %v1082
    %v1677 = vunpack.c.l.b16 %v1083
    %v1678 = vunpack.c.h.b16 %v1083
    %v1679 = vunpack.c.l.b16 %v1084
    %v1680 = vunpack.c.h.b16 %v1084
    %v1681 = vunpack.c.l.b16 %v1085
    %v1682 = vunpack.c.h.b16 %v1085
    %v1683 = vunpack.c.l.b16 %v1086
    %v1684 = vunpack.c.h.b16 %v1086
    %v1685 = vunpack.c.l.b16 %v1087
    %v1686 = vunpack.c.h.b16 %v1087
    %v1687 = vunpack.c.l.b16 %v1088
    %v1688 = vunpack.c.h.b16 %v1088
    %v1689 = vunpack.c.l.b16 %v1089
    %v1690 = vunpack.c.h.b16 %v1089
    %v1691 = vunpack.c.l.b16 %v1090
    %v1692 = vunpack.c.h.b16 %v1090
    %v1693 = vunpack.c.l.b16 %v1091
    %v1694 = vunpack.c.h.b16 %v1091
    %v1695 = vunpack.c.l.b16 %v1092
    %v1696 = vunpack.c.h.b16 %v1092
    %v1697 = vunpack.c.l.b16 %v1093
    %v1698 = vunpack.c.h.b16 %v1093
    %v1699 = vunpack.c.l.b16 %v1094
    %v1700 = vunpack.c.h.b16 %v1094
    %v1701 = vunpack.c.l.b16 %v1095
    %v1702 = vunpack.c.h.b16 %v1095
    %v1703 = vunpack.c.l.b16 %v1096
    %v1704 = vunpack.c.h.b16 %v1096
    %v1705 = vunpack.c.l.b16 %v1097
    %v1706 = vunpack.c.h.b16 %v1097
    %v1707 = vunpack.c.l.b16 %v1098
    %v1708 = vunpack.c.h.b16 %v1098
    %v1709 = vunpack.c.l.b16 %v1099
    %v1710 = vunpack.c.h.b16 %v1099
    %v1711 = vunpack.c.l.b16 %v1100
    %v1712 = vunpack.c.h.b16 %v1100
    %v1713 = vunpack.c.l.b16 %v1101
    %v1714 = vunpack.c.h.b16 %v1101
    %v1715 = vunpack.c.l.b16 %v1102
    %v1716 = vunpack.c.h.b16 %v1102
    %v1717 = vunpack.c.l.b16 %v1103
    %v1718 = vunpack.c.h.b16 %v1103
    %v1719 = vunpack.c.l.b16 %v1104
    %v1720 = vunpack.c.h.b16 %v1104
    %v1721 = vunpack.c.l.b16 %v1105
    %v1722 = vunpack.c.h.b16 %v1105
    %v1723 = vunpack.c.l.b16 %v1106
    %v1724 = vunpack.c.h.b16 %v1106
    %v1725 = vunpack.c.l.b16 %v1107
    %v1726 = vunpack.c.h.b16 %v1107
    %v1727 = vunpack.c.l.b16 %v1108
    %v1728 = vunpack.c.h.b16 %v1108
    %v1729 = vunpack.c.l.b16 %v1109
    %v1730 = vunpack.c.h.b16 %v1109
    %v1731 = vunpack.c.l.b16 %v1110
    %v1732 = vunpack.c.h.b16 %v1110
    %v1733 = vunpack.c.l.b16 %v1111
    %v1734 = vunpack.c.h.b16 %v1111
    %v1735 = vunpack.c.l.b16 %v1112
    %v1736 = vunpack.c.h.b16 %v1112
    %v1737 = vunpack.c.l.b16 %v1113
    %v1738 = vunpack.c.h.b16 %v1113
    %v1739 = vunpack.c.l.b16 %v1114
    %v1740 = vunpack.c.h.b16 %v1114
    %v1741 = vunpack.c.l.b16 %v1115
    %v1742 = vunpack.c.h.b16 %v1115
    %v1743 = vunpack.c.l.b16 %v1116
    %v1744 = vunpack.c.h.b16 %v1116
    %v1745 = vunpack.c.l.b16 %v1117
    %v1746 = vunpack.c.h.b16 %v1117
    %v1747 = vunpack.c.l.b16 %v1118
    %v1748 = vunpack.c.h.b16 %v1118
    %v1749 = vunpack.c.l.b16 %v1119
    %v1750 = vunpack.c.h.b16 %v1119
    %v1751 = vunpack.c.l.b16 %v1120
    %v1752 = vunpack.c.h.b16 %v1120
    %v1753 = vunpack.c.l.b16 %v1121
    %v1754 = vunpack.c.h.b16 %v1121
    %v1755 = vunpack.c.l.b16 %v1122
    %v1756 = vunpack.c.h.b16 %v1122
    %v1757 = vunpack.c.l.b16 %v1123
    %v1758 = vunpack.c.h.b16 %v1123
    %v1759 = vunpack.c.l.b16 %v1124
    %v1760 = vunpack.c.h.b16 %v1124
    %v1761 = vunpack.c.l.b16 %v1125
    %v1762 = vunpack.c.h.b16 %v1125
    %v1763 = vunpack.c.l.b16 %v1126
    %v1764 = vunpack.c.h.b16 %v1126
    %v1765 = vunpack.c.l.b16 %v1127
    %v1766 = vunpack.c.h.b16 %v1127
    %v1767 = vunpack.c.l.b16 %v1128
    %v1768 = vunpack.c.h.b16 %v1128
    %v1769 = vunpack.c.l.b16 %v1129
    %v1770 = vunpack.c.h.b16 %v1129
    %v1771 = vunpack.c.l.b16 %v1130
    %v1772 = vunpack.c.h.b16 %v1130
    %v1773 = vunpack.c.l.b16 %v1131
    %v1774 = vunpack.c.h.b16 %v1131
    %v1775 = vunpack.c.l.b16 %v1132
    %v1776 = vunpack.c.h.b16 %v1132
    %v1777 = vunpack.c.l.b16 %v1133
    %v1778 = vunpack.c.h.b16 %v1133
    %v1779 = vunpack.c.l.b16 %v1134
    %v1780 = vunpack.c.h.b16 %v1134
    %v1781 = vunpack.c.l.b16 %v1135
    %v1782 = vunpack.c.h.b16 %v1135
    %v1783 = vunpack.c.l.b16 %v1136
    %v1784 = vunpack.c.h.b16 %v1136
    %v1785 = vunpack.c.l.b16 %v1137
    %v1786 = vunpack.c.h.b16 %v1137
    %v1787 = vunpack.c.l.b16 %v1138
    %v1788 = vunpack.c.h.b16 %v1138
    %v1789 = vunpack.c.l.b16 %v1139
    %v1790 = vunpack.c.h.b16 %v1139
    %v1791 = vunpack.c.l.b16 %v1140
    %v1792 = vunpack.c.h.b16 %v1140
    %v1793 = vunpack.c.l.b16 %v1141
    %v1794 = vunpack.c.h.b16 %v1141
    %v1795 = vunpack.c.l.b16 %v1142
    %v1796 = vunpack.c.h.b16 %v1142
    %v1797 = vunpack.c.l.b16 %v1143
    %v1798 = vunpack.c.h.b16 %v1143
    %v1799 = vunpack.c.l.b16 %v1144
    %v1800 = vunpack.c.h.b16 %v1144
    %v1801 = vunpack.c.l.b16 %v1145
    %v1802 = vunpack.c.h.b16 %v1145
    %v1803 = vunpack.c.l.b16 %v1146
    %v1804 = vunpack.c.h.b16 %v1146
    %v1805 = vunpack.c.l.b16 %v1147
    %v1806 = vunpack.c.h.b16 %v1147
    %v1807 = vunpack.c.l.b16 %v1148
    %v1808 = vunpack.c.h.b16 %v1148
    %v1809 = vunpack.c.l.b16 %v1149
    %v1810 = vunpack.c.h.b16 %v1149
    %v1811 = vunpack.c.l.b16 %v1150
    %v1812 = vunpack.c.h.b16 %v1150
    %v1813 = vunpack.c.l.b16 %v1151
    %v1814 = vunpack.c.h.b16 %v1151
    %v1815 = vunpack.c.l.b16 %v1152
    %v1816 = vunpack.c.h.b16 %v1152
    %v1817 = vunpack.c.l.b16 %v1153
    %v1818 = vunpack.c.h.b16 %v1153
    %v1819 = vunpack.c.l.b16 %v1154
    %v1820 = vunpack.c.h.b16 %v1154
    %v1821 = vunpack.c.l.b16 %v1155
    %v1822 = vunpack.c.h.b16 %v1155
    %v1823 = vunpack.c.l.b16 %v1156
    %v1824 = vunpack.c.h.b16 %v1156
    %v1825 = vunpack.c.l.b16 %v1157
    %v1826 = vunpack.c.h.b16 %v1157
    %v1827 = vunpack.c.l.b16 %v1158
    %v1828 = vunpack.c.h.b16 %v1158
    %v1829 = vunpack.c.l.b16 %v1159
    %v1830 = vunpack.c.h.b16 %v1159
    %v1831 = vunpack.c.l.b16 %v1160
    %v1832 = vunpack.c.h.b16 %v1160
    %v1833 = vunpack.c.l.b16 %v1161
    %v1834 = vunpack.c.h.b16 %v1161
    %v1835 = vunpack.c.l.b16 %v1162
    %v1836 = vunpack.c.h.b16 %v1162
    %v1837 = vunpack.c.l.b16 %v1163
    %v1838 = vunpack.c.h.b16 %v1163
    %v1839 = vunpack.c.l.b16 %v1164
    %v1840 = vunpack.c.h.b16 %v1164
    %v1841 = vunpack.c.l.b16 %v1165
    %v1842 = vunpack.c.h.b16 %v1165
    %v1843 = vunpack.c.l.b16 %v1166
    %v1844 = vunpack.c.h.b16 %v1166
    %v1845 = vunpack.c.l.b16 %v1167
    %v1846 = vunpack.c.h.b16 %v1167
    %v1847 = vunpack.c.l.b16 %v1168
    %v1848 = vunpack.c.h.b16 %v1168
    %v1849 = vunpack.c.l.b16 %v1169
    %v1850 = vunpack.c.h.b16 %v1169
    %v1851 = vunpack.c.l.b16 %v1170
    %v1852 = vunpack.c.h.b16 %v1170
    %v1853 = vunpack.c.l.b16 %v1171
    %v1854 = vunpack.c.h.b16 %v1171
    %v1855 = vunpack.c.l.b16 %v1172
    %v1856 = vunpack.c.h.b16 %v1172
    %v1857 = vunpack.c.l.b16 %v1173
    %v1858 = vunpack.c.h.b16 %v1173
    %v1859 = vunpack.c.l.b16 %v1174
    %v1860 = vunpack.c.h.b16 %v1174
    %v1861 = vunpack.c.l.b16 %v1175
    %v1862 = vunpack.c.h.b16 %v1175
    %v1863 = vunpack.c.l.b16 %v1176
    %v1864 = vunpack.c.h.b16 %v1176
    %v1865 = vunpack.c.l.b16 %v1177
    %v1866 = vunpack.c.h.b16 %v1177
    %v1867 = vunpack.c.l.b16 %v1178
    %v1868 = vunpack.c.h.b16 %v1178
    %v1869 = vunpack.c.l.b16 %v1179
    %v1870 = vunpack.c.h.b16 %v1179
    %v1871 = vunpack.c.l.b16 %v1180
    %v1872 = vunpack.c.h.b16 %v1180
    %v1873 = vunpack.c.l.b16 %v1181
    %v1874 = vunpack.c.h.b16 %v1181
    %v1875 = vunpack.c.l.b16 %v1182
    %v1876 = vunpack.c.h.b16 %v1182
    %v1877 = vunpack.c.l.b16 %v1183
    %v1878 = vunpack.c.h.b16 %v1183
    %v1879 = vunpack.c.l.b16 %v1184
    %v1880 = vunpack.c.h.b16 %v1184
    %v1881 = vunpack.c.l.b16 %v1185
    %v1882 = vunpack.c.h.b16 %v1185
    %v1883 = vunpack.c.l.b16 %v1186
    %v1884 = vunpack.c.h.b16 %v1186
    %v1885 = vunpack.c.l.b16 %v1187
    %v1886 = vunpack.c.h.b16 %v1187
    %v1887 = vunpack.c.l.b16 %v1188
    %v1888 = vunpack.c.h.b16 %v1188
    %v1889 = vunpack.c.l.b16 %v1189
    %v1890 = vunpack.c.h.b16 %v1189
    %v1891 = vunpack.c.l.b16 %v1190
    %v1892 = vunpack.c.h.b16 %v1190
    %v1893 = vunpack.c.l.b16 %v1191
    %v1894 = vunpack.c.h.b16 %v1191
    %v1895 = vunpack.c.l.b16 %v1192
    %v1896 = vunpack.c.h.b16 %v1192
    %v1897 = vunpack.c.l.b16 %v1193
    %v1898 = vunpack.c.h.b16 %v1193
    %v1899 = vunpack.c.l.b16 %v1194
    %v1900 = vunpack.c.h.b16 %v1194
    %v1901 = vunpack.c.l.b16 %v1195
    %v1902 = vunpack.c.h.b16 %v1195
    %v1903 = vunpack.c.l.b16 %v1196
    %v1904 = vunpack.c.h.b16 %v1196
    %v1905 = vunpack.c.l.b16 %v1197
    %v1906 = vunpack.c.h.b16 %v1197
    %v1907 = vunpack.c.l.b16 %v1198
    %v1908 = vunpack.c.h.b16 %v1198
    %v1909 = vunpack.c.l.b16 %v1199
    %v1910 = vunpack.c.h.b16 %v1199
    %v1911 = vunpack.c.l.b16 %v1200
    %v1912 = vunpack.c.h.b16 %v1200
    %v1913 = vunpack.c.l.b16 %v1201
    %v1914 = vunpack.c.h.b16 %v1201
    %v1915 = vunpack.c.l.b16 %v1202
    %v1916 = vunpack.c.h.b16 %v1202
    %v1917 = vunpack.c.l.b16 %v1203
    %v1918 = vunpack.c.h.b16 %v1203
    %v1919 = vunpack.c.l.b16 %v1204
    %v1920 = vunpack.c.h.b16 %v1204
    %v1921 = vunpack.c.l.b16 %v1205
    %v1922 = vunpack.c.h.b16 %v1205
    %v1923 = vunpack.c.l.b16 %v1206
    %v1924 = vunpack.c.h.b16 %v1206
    %v1925 = vunpack.c.l.b16 %v1207
    %v1926 = vunpack.c.h.b16 %v1207
    %v1927 = vunpack.c.l.b16 %v1208
    %v1928 = vunpack.c.h.b16 %v1208
    %v1929 = vunpack.c.l.b16 %v1209
    %v1930 = vunpack.c.h.b16 %v1209
    %v1931 = vunpack.c.l.b16 %v1210
    %v1932 = vunpack.c.h.b16 %v1210
    %v1933 = vunpack.c.l.b16 %v1211
    %v1934 = vunpack.c.h.b16 %v1211
    %v1935 = vunpack.c.l.b16 %v1212
    %v1936 = vunpack.c.h.b16 %v1212
    %v1937 = vunpack.c.l.b16 %v1213
    %v1938 = vunpack.c.h.b16 %v1213
    %v1939 = vunpack.c.l.b16 %v1214
    %v1940 = vunpack.c.h.b16 %v1214
    %v1941 = vunpack.c.l.b16 %v1215
    %v1942 = vunpack.c.h.b16 %v1215
    %v1943 = vunpack.c.l.b16 %v1216
    %v1944 = vunpack.c.h.b16 %v1216
    %v1945 = vunpack.c.l.b16 %v1217
    %v1946 = vunpack.c.h.b16 %v1217
    %v1947 = vunpack.c.l.b16 %v1218
    %v1948 = vunpack.c.h.b16 %v1218
    %v1949 = vunpack.c.l.b16 %v1219
    %v1950 = vunpack.c.h.b16 %v1219
    %v1951 = vunpack.c.l.b16 %v1220
    %v1952 = vunpack.c.h.b16 %v1220
    %v1953 = vunpack.c.l.b16 %v1221
    %v1954 = vunpack.c.h.b16 %v1221
    %v1955 = vunpack.c.l.b16 %v1222
    %v1956 = vunpack.c.h.b16 %v1222
    %v1957 = vunpack.c.l.b16 %v1223
    %v1958 = vunpack.c.h.b16 %v1223
    %v1959 = vunpack.c.l.b16 %v1224
    %v1960 = vunpack.c.h.b16 %v1224
    %v1961 = vunpack.c.l.b16 %v1225
    %v1962 = vunpack.c.h.b16 %v1225
    %v1963 = vunpack.c.l.b16 %v1226
    %v1964 = vunpack.c.h.b16 %v1226
    %v1965 = vunpack.c.l.b16 %v1227
    %v1966 = vunpack.c.h.b16 %v1227
    %v1967 = vunpack.c.l.b16 %v1228
    %v1968 = vunpack.c.h.b16 %v1228
    %v1969 = vunpack.c.l.b16 %v1229
    %v1970 = vunpack.c.h.b16 %v1229
    %v1971 = vunpack.c.l.b16 %v1230
    %v1972 = vunpack.c.h.b16 %v1230
    %v1973 = vunpack.c.l.b16 %v1231
    %v1974 = vunpack.c.h.b16 %v1231
    %v1975 = vunpack.c.l.b16 %v1232
    %v1976 = vunpack.c.h.b16 %v1232
    %v1977 = vunpack.c.l.b16 %v1233
    %v1978 = vunpack.c.h.b16 %v1233
    %v1979 = vunpack.c.l.b16 %v1234
    %v1980 = vunpack.c.h.b16 %v1234
    %v1981 = vunpack.c.l.b16 %v1235
    %v1982 = vunpack.c.h.b16 %v1235
    %v1983 = vunpack.c.l.b16 %v1236
    %v1984 = vunpack.c.h.b16 %v1236
    %v1985 = vunpack.c.l.b16 %v1237
    %v1986 = vunpack.c.h.b16 %v1237
    %v1987 = vunpack.c.l.b16 %v1238
    %v1988 = vunpack.c.h.b16 %v1238
    %v1989 = vunpack.c.l.b16 %v1239
    %v1990 = vunpack.c.h.b16 %v1239
    %v1991 = vunpack.c.l.b16 %v1240
    %v1992 = vunpack.c.h.b16 %v1240
    %v1993 = vunpack.c.l.b16 %v1241
    %v1994 = vunpack.c.h.b16 %v1241
    %v1995 = vunpack.c.l.b16 %v1242
    %v1996 = vunpack.c.h.b16 %v1242
    %v1997 = vunpack.c.l.b16 %v1243
    %v1998 = vunpack.c.h.b16 %v1243
    %v1999 = vunpack.c.l.b16 %v1244
    %v2000 = vunpack.c.h.b16 %v1244
    %v2001 = vunpack.c.l.b16 %v1245
    %v2002 = vunpack.c.h.b16 %v1245
    %v2003 = vunpack.c.l.b16 %v1246
    %v2004 = vunpack.c.h.b16 %v1246
    %v2005 = vunpack.c.l.b16 %v1247
    %v2006 = vunpack.c.h.b16 %v1247
    %v2007 = vunpack.c.l.b16 %v1248
    %v2008 = vunpack.c.h.b16 %v1248
    %v2009 = vunpack.c.l.b16 %v1249
    %v2010 = vunpack.c.h.b16 %v1249
    %v2011 = vunpack.c.l.b16 %v1250
    %v2012 = vunpack.c.h.b16 %v1250
    %v2013 = vunpack.c.l.b16 %v1251
    %v2014 = vunpack.c.h.b16 %v1251
    %v2015 = vunpack.c.l.b16 %v1252
    %v2016 = vunpack.c.h.b16 %v1252
    %v2017 = vunpack.c.l.b16 %v1253
    %v2018 = vunpack.c.h.b16 %v1253
    %v2019 = vunpack.c.l.b16 %v1254
    %v2020 = vunpack.c.h.b16 %v1254
    %v2021 = vunpack.c.l.b16 %v1255
    %v2022 = vunpack.c.h.b16 %v1255
    %v2023 = vunpack.c.l.b16 %v1256
    %v2024 = vunpack.c.h.b16 %v1256
    %v2025 = vunpack.c.l.b16 %v1257
    %v2026 = vunpack.c.h.b16 %v1257
    %v2027 = vunpack.c.l.b16 %v1258
    %v2028 = vunpack.c.h.b16 %v1258
    %v2029 = vunpack.c.l.b16 %v1259
    %v2030 = vunpack.c.h.b16 %v1259
    %v2031 = vunpack.c.l.b16 %v1260
    %v2032 = vunpack.c.h.b16 %v1260
    %v2033 = vunpack.c.l.b16 %v1261
    %v2034 = vunpack.c.h.b16 %v1261
    %v2035 = vunpack.c.l.b16 %v1262
    %v2036 = vunpack.c.h.b16 %v1262
    %v2037 = vunpack.c.l.b16 %v1263
    %v2038 = vunpack.c.h.b16 %v1263
    %v2039 = vpack.c.b16 %v1661, %v1655
    %v2040 = vpack.c.b16 %v1662, %v1656
    %v2041 = vpack.c.b16 %v1663, %v1657
    %v2042 = vpack.c.b16 %v1664, %v1658
    %v2043 = vpack.c.b16 %v1665, %v1659
    %v2044 = vpack.c.b16 %v1666, %v1660
    %v2045 = vpack.c.b16 %v1673, %v1667
    %v2046 = vpack.c.b16 %v1674, %v1668
    %v2047 = vpack.c.b16 %v1675, %v1669
    %v2048 = vpack.c.b16 %v1676, %v1670
    %v2049 = vpack.c.b16 %v1677, %v1671
    %v2050 = vpack.c.b16 %v1678, %v1672
    %v2051 = vpack.c.b16 %v1685, %v1679
    %v2052 = vpack.c.b16 %v1686, %v1680
    %v2053 = vpack.c.b16 %v1687, %v1681
    %v2054 = vpack.c.b16 %v1688, %v1682
    %v2055 = vpack.c.b16 %v1689, %v1683
    %v2056 = vpack.c.b16 %v1690, %v1684
    %v2057 = vpack.c.b16 %v1697, %v1691
    %v2058 = vpack.c.b16 %v1698, %v1692
    %v2059 = vpack.c.b16 %v1699, %v1693
    %v2060 = vpack.c.b16 %v1700, %v1694
    %v2061 = vpack.c.b16 %v1701, %v1695
    %v2062 = vpack.c.b16 %v1702, %v1696
    %v2063 = vpack.c.b16 %v1709, %v1703
    %v2064 = vpack.c.b16 %v1710, %v1704
    %v2065 = vpack.c.b16 %v1711, %v1705
    %v2066 = vpack.c.b16 %v1712, %v1706
    %v2067 = vpack.c.b16 %v1713, %v1707
    %v2068 = vpack.c.b16 %v1714, %v1708
    %v2069 = vpack.c.b16 %v1721, %v1715
    %v2070 = vpack.c.b16 %v1722, %v1716
    %v2071 = vpack.c.b16 %v1723, %v1717
    %v2072 = vpack.c.b16 %v1724, %v1718
    %v2073 = vpack.c.b16 %v1725, %v1719
    %v2074 = vpack.c.b16 %v1726, %v1720
    %v2075 = vpack.c.b16 %v1733, %v1727
    %v2076 = vpack.c.b16 %v1734, %v1728
    %v2077 = vpack.c.b16 %v1735, %v1729
    %v2078 = vpack.c.b16 %v1736, %v1730
    %v2079 = vpack.c.b16 %v1737, %v1731
    %v2080 = vpack.c.b16 %v1738, %v1732
    %v2081 = vpack.c.b16 %v1745, %v1739
    %v2082 = vpack.c.b16 %v1746, %v1740
    %v2083 = vpack.c.b16 %v1747, %v1741
    %v2084 = vpack.c.b16 %v1748, %v1742
    %v2085 = vpack.c.b16 %v1749, %v1743
    %v2086 = vpack.c.b16 %v1750, %v1744
    %v2087 = vpack.c.b16 %v1757, %v1751
    %v2088 = vpack.c.b16 %v1758, %v1752
    %v2089 = vpack.c.b16 %v1759, %v1753
    %v2090 = vpack.c.b16 %v1760, %v1754
    %v2091 = vpack.c.b16 %v1761, %v1755
    %v2092 = vpack.c.b16 %v1762, %v1756
    %v2093 = vpack.c.b16 %v1769, %v1763
    %v2094 = vpack.c.b16 %v1770, %v1764
    %v2095 = vpack.c.b16 %v1771, %v1765
    %v2096 = vpack.c.b16 %v1772, %v1766
    %v2097 = vpack.c.b16 %v1773, %v1767
    %v2098 = vpack.c.b16 %v1774, %v1768
    %v2099 = vpack.c.b16 %v1781, %v1775
    %v2100 = vpack.c.b16 %v1782, %v1776
    %v2101 = vpack.c.b16 %v1783, %v1777
    %v2102 = vpack.c.b16 %v1784, %v1778
    %v2103 = vpack.c.b16 %v1785, %v1779
    %v2104 = vpack.c.b16 %v1786, %v1780
    %v2105 = vpack.c.b16 %v1793, %v1787
    %v2106 = vpack.c.b16 %v1794, %v1788
    %v2107 = vpack.c.b16 %v1795, %v1789
    %v2108 = vpack.c.b16 %v1796, %v1790
    %v2109 = vpack.c.b16 %v1797, %v1791
    %v2110 = vpack.c.b16 %v1798, %v1792
    %v2111 = vpack.c.b16 %v1805, %v1799
    %v2112 = vpack.c.b16 %v1806, %v1800
    %v2113 = vpack.c.b16 %v1807, %v1801
    %v2114 = vpack.c.b16 %v1808, %v1802
    %v2115 = vpack.c.b16 %v1809, %v1803
    %v2116 = vpack.c.b16 %v1810, %v1804
    %v2117 = vpack.c.b16 %v1817, %v1811
    %v2118 = vpack.c.b16 %v1818, %v1812
    %v2119 = vpack.c.b16 %v1819, %v1813
    %v2120 = vpack.c.b16 %v1820, %v1814
    %v2121 = vpack.c.b16 %v1821, %v1815
    %v2122 = vpack.c.b16 %v1822, %v1816
    %v2123 = vpack.c.b16 %v1829, %v1823
    %v2124 = vpack.c.b16 %v1830, %v1824
    %v2125 = vpack.c.b16 %v1831, %v1825
    %v2126 = vpack.c.b16 %v1832, %v1826
    %v2127 = vpack.c.b16 %v1833, %v1827
    %v2128 = vpack.c.b16 %v1834, %v1828
    %v2129 = vpack.c.b16 %v1841, %v1835
    %v2130 = vpack.c.b16 %v1842, %v1836
    %v2131 = vpack.c.b16 %v1843, %v1837
    %v2132 = vpack.c.b16 %v1844, %v1838
    %v2133 = vpack.c.b16 %v1845, %v1839
    %v2134 = vpack.c.b16 %v1846, %v1840
    %v2135 = vpack.c.b16 %v1853, %v1847
    %v2136 = vpack.c.b16 %v1854, %v1848
    %v2137 = vpack.c.b16 %v1855, %v1849
    %v2138 = vpack.c.b16 %v1856, %v1850
    %v2139 = vpack.c.b16 %v1857, %v1851
    %v2140 = vpack.c.b16 %v1858, %v1852
    %v2141 = vpack.c.b16 %v1865, %v1859
    %v2142 = vpack.c.b16 %v1866, %v1860
    %v2143 = vpack.c.b16 %v1867, %v1861
    %v2144 = vpack.c.b16 %v1868, %v1862
    %v2145 = vpack.c.b16 %v1869, %v1863
    %v2146 = vpack.c.b16 %v1870, %v1864
    %v2147 = vpack.c.b16 %v1877, %v1871
    %v2148 = vpack.c.b16 %v1878, %v1872
    %v2149 = vpack.c.b16 %v1879, %v1873
    %v2150 = vpack.c.b16 %v1880, %v1874
    %v2151 = vpack.c.b16 %v1881, %v1875
    %v2152 = vpack.c.b16 %v1882, %v1876
    %v2153 = vpack.c.b16 %v1889, %v1883
    %v2154 = vpack.c.b16 %v1890, %v1884
    %v2155 = vpack.c.b16 %v1891, %v1885
    %v2156 = vpack.c.b16 %v1892, %v1886
    %v2157 = vpack.c.b16 %v1893, %v1887
    %v2158 = vpack.c.b16 %v1894, %v1888
    %v2159 = vpack.c.b16 %v1901, %v1895
    %v2160 = vpack.c.b16 %v1902, %v1896
    %v2161 = vpack.c.b16 %v1903, %v1897
    %v2162 = vpack.c.b16 %v1904, %v1898
    %v2163 = vpack.c.b16 %v1905, %v1899
    %v2164 = vpack.c.b16 %v1906, %v1900
    %v2165 = vpack.c.b16 %v1913, %v1907
    %v2166 = vpack.c.b16 %v1914, %v1908
    %v2167 = vpack.c.b16 %v1915, %v1909
    %v2168 = vpack.c.b16 %v1916, %v1910
    %v2169 = vpack.c.b16 %v1917, %v1911
    %v2170 = vpack.c.b16 %v1918, %v1912
    %v2171 = vpack.c.b16 %v1925, %v1919
    %v2172 = vpack.c.b16 %v1926, %v1920
    %v2173 = vpack.c.b16 %v1927, %v1921
    %v2174 = vpack.c.b16 %v1928, %v1922
    %v2175 = vpack.c.b16 %v1929, %v1923
    %v2176 = vpack.c.b16 %v1930, %v1924
    %v2177 = vpack.c.b16 %v1937, %v1931
    %v2178 = vpack.c.b16 %v1938, %v1932
    %v2179 = vpack.c.b16 %v1939, %v1933
    %v2180 = vpack.c.b16 %v1940, %v1934
    %v2181 = vpack.c.b16 %v1941, %v1935
    %v2182 = vpack.c.b16 %v1942, %v1936
    %v2183 = vpack.c.b16 %v1949, %v1943
    %v2184 = vpack.c.b16 %v1950, %v1944
    %v2185 = vpack.c.b16 %v1951, %v1945
    %v2186 = vpack.c.b16 %v1952, %v1946
    %v2187 = vpack.c.b16 %v1953, %v1947
    %v2188 = vpack.c.b16 %v1954, %v1948
    %v2189 = vpack.c.b16 %v1961, %v1955
    %v2190 = vpack.c.b16 %v1962, %v1956
    %v2191 = vpack.c.b16 %v1963, %v1957
    %v2192 = vpack.c.b16 %v1964, %v1958
    %v2193 = vpack.c.b16 %v1965, %v1959
    %v2194 = vpack.c.b16 %v1966, %v1960
    %v2195 = vpack.c.b16 %v1973, %v1967
    %v2196 = vpack.c.b16 %v1974, %v1968
    %v2197 = vpack.c.b16 %v1975, %v1969
    %v2198 = vpack.c.b16 %v1976, %v1970
    %v2199 = vpack.c.b16 %v1977, %v1971
    %v2200 = vpack.c.b16 %v1978, %v1972
    %v2201 = vpack.c.b16 %v1985, %v1979
    %v2202 = vpack.c.b16 %v1986, %v1980
    %v2203 = vpack.c.b16 %v1987, %v1981
    %v2204 = vpack.c.b16 %v1988, %v1982
    %v2205 = vpack.c.b16 %v1989, %v1983
    %v2206 = vpack.c.b16 %v1990, %v1984
    %v2207 = vpack.c.b16 %v1997, %v1991
    %v2208 = vpack.c.b16 %v1998, %v1992
    %v2209 = vpack.c.b16 %v1999, %v1993
    %v2210 = vpack.c.b16 %v2000, %v1994
    %v2211 = vpack.c.b16 %v2001, %v1995
    %v2212 = vpack.c.b16 %v2002, %v1996
    %v2213 = vpack.c.b16 %v2009, %v2003
    %v2214 = vpack.c.b16 %v2010, %v2004
    %v2215 = vpack.c.b16 %v2011, %v2005
    %v2216 = vpack.c.b16 %v2012, %v2006
    %v2217 = vpack.c.b16 %v2013, %v2007
    %v2218 = vpack.c.b16 %v2014, %v2008
    %v2219 = vpack.c.b16 %v2021, %v2015
    %v2220 = vpack.c.b16 %v2022, %v2016
    %v2221 = vpack.c.b16 %v2023, %v2017
    %v2222 = vpack.c.b16 %v2024, %v2018
    %v2223 = vpack.c.b16 %v2025, %v2019
    %v2224 = vpack.c.b16 %v2026, %v2020
    %v2225 = vpack.c.b16 %v2033, %v2027
    %v2226 = vpack.c.b16 %v2034, %v2028
    %v2227 = vpack.c.b16 %v2035, %v2029
    %v2228 = vpack.c.b16 %v2036, %v2030
    %v2229 = vpack.c.b16 %v2037, %v2031
    %v2230 = vpack.c.b16 %v2038, %v2032
    %2423 = vmatprep.subr.bf16.mxu0 %v2040
    %2424 = vmatpush1.bf16.msra.mxu0 %v2039
    %2425 = vmatprep.subr.bf16.mxu0 %v2046
    %2426 = vmatpush1.bf16.msra.mxu0 %v2045
    %2427 = vmatprep.subr.bf16.mxu0 %v2052
    %2428 = vmatpush1.bf16.msra.mxu0 %v2051
    %2429 = vmatprep.subr.bf16.mxu0 %v2058
    %2430 = vmatpush1.bf16.msra.mxu0 %v2057
    %2431 = vmatprep.subr.bf16.mxu0 %v2064
    %2432 = vmatpush1.bf16.msra.mxu0 %v2063
    %2433 = vmatprep.subr.bf16.mxu0 %v2070
    %2434 = vmatpush1.bf16.msra.mxu0 %v2069
    %2435 = vmatprep.subr.bf16.mxu0 %v2076
    %2436 = vmatpush1.bf16.msra.mxu0 %v2075
    %2437 = vmatprep.subr.bf16.mxu0 %v2082
    %2438 = vmatpush1.bf16.msra.mxu0 %v2081
    %2439 = vmatprep.subr.bf16.mxu0 %v2088
    %2440 = vmatpush1.bf16.msra.mxu0 %v2087
    %2441 = vmatprep.subr.bf16.mxu0 %v2094
    %2442 = vmatpush1.bf16.msra.mxu0 %v2093
    %2443 = vmatprep.subr.bf16.mxu0 %v2100
    %2444 = vmatpush1.bf16.msra.mxu0 %v2099
    %2445 = vmatprep.subr.bf16.mxu0 %v2106
    %2446 = vmatpush1.bf16.msra.mxu0 %v2105
    %2447 = vmatprep.subr.bf16.mxu0 %v2112
    %2448 = vmatpush1.bf16.msra.mxu0 %v2111
    %2449 = vmatprep.subr.bf16.mxu0 %v2118
    %2450 = vmatpush1.bf16.msra.mxu0 %v2117
    %2451 = vmatprep.subr.bf16.mxu0 %v2124
    %2452 = vmatpush1.bf16.msra.mxu0 %v2123
    %2453 = vmatprep.subr.bf16.mxu0 %v2130
    %2454 = vmatpush1.bf16.msra.mxu0 %v2129
    %2455 = vmatprep.mubr.bf16.mxu0 %v1456
    %2456 = vmatmul.mubr.bf16.gmra.mrb[0].mxu0 %v1455
    %v2457 = vpop.f32.mrb[0].mxu0
    %v2458 = vadd.f32 0.0, %v2457
    %v2459 = vpop.f32.mrb[0].mxu0
    %v2460 = vadd.f32 0.0, %v2459
    %v2461 = vpop.f32.mrb[0].mxu0
    %v2462 = vadd.f32 0.0, %v2461
    %v2463 = vpop.f32.mrb[0].mxu0
    %v2464 = vadd.f32 0.0, %v2463
    %2465 = vdwg.mxu0
    %2466 = vmatprep.subr.bf16.mxu0 %v2136
    %2467 = vmatpush1.bf16.msra.mxu0 %v2135
    %2468 = vmatprep.subr.bf16.mxu0 %v2142
    %2469 = vmatpush1.bf16.msra.mxu0 %v2141
    %2470 = vmatprep.subr.bf16.mxu0 %v2148
    %2471 = vmatpush1.bf16.msra.mxu0 %v2147
    %2472 = vmatprep.subr.bf16.mxu0 %v2154
    %2473 = vmatpush1.bf16.msra.mxu0 %v2153
    %2474 = vmatprep.subr.bf16.mxu0 %v2160
    %2475 = vmatpush1.bf16.msra.mxu0 %v2159
    %2476 = vmatprep.subr.bf16.mxu0 %v2166
    %2477 = vmatpush1.bf16.msra.mxu0 %v2165
    %2478 = vmatprep.subr.bf16.mxu0 %v2172
    %2479 = vmatpush1.bf16.msra.mxu0 %v2171
    %2480 = vmatprep.subr.bf16.mxu0 %v2178
    %2481 = vmatpush1.bf16.msra.mxu0 %v2177
    %2482 = vmatprep.subr.bf16.mxu0 %v2184
    %2483 = vmatpush1.bf16.msra.mxu0 %v2183
    %2484 = vmatprep.subr.bf16.mxu0 %v2190
    %2485 = vmatpush1.bf16.msra.mxu0 %v2189
    %2486 = vmatprep.subr.bf16.mxu0 %v2196
    %2487 = vmatpush1.bf16.msra.mxu0 %v2195
    %2488 = vmatprep.subr.bf16.mxu0 %v2202
    %2489 = vmatpush1.bf16.msra.mxu0 %v2201
    %2490 = vmatprep.subr.bf16.mxu0 %v2208
    %2491 = vmatpush1.bf16.msra.mxu0 %v2207
    %2492 = vmatprep.subr.bf16.mxu0 %v2214
    %2493 = vmatpush1.bf16.msra.mxu0 %v2213
    %2494 = vmatprep.subr.bf16.mxu0 %v2220
    %2495 = vmatpush1.bf16.msra.mxu0 %v2219
    %2496 = vmatprep.subr.bf16.mxu0 %v2226
    %2497 = vmatpush1.bf16.msra.mxu0 %v2225
    %2498 = vmatprep.mubr.bf16.mxu0 %v1458
    %2499 = vmatmul.mubr.bf16.gmra.mrb[0].mxu0 %v1457
    %v2500 = vpop.f32.mrb[0].mxu0
    %v2501 = vadd.f32 %v2458, %v2500
    %v2502 = vpop.f32.mrb[0].mxu0
    %v2503 = vadd.f32 %v2460, %v2502
    %v2504 = vpop.f32.mrb[0].mxu0
    %v2505 = vadd.f32 %v2462, %v2504
    %v2506 = vpop.f32.mrb[0].mxu0
    %v2507 = vadd.f32 %v2464, %v2506
    %2508 = vdwg.mxu0
    %2509 = vmatprep.subr.bf16.mxu0 %v2042
    %2510 = vmatpush1.bf16.msra.mxu0 %v2041
    %2511 = vmatprep.subr.bf16.mxu0 %v2048
    %2512 = vmatpush1.bf16.msra.mxu0 %v2047
    %2513 = vmatprep.subr.bf16.mxu0 %v2054
    %2514 = vmatpush1.bf16.msra.mxu0 %v2053
    %2515 = vmatprep.subr.bf16.mxu0 %v2060
    %2516 = vmatpush1.bf16.msra.mxu0 %v2059
    %2517 = vmatprep.subr.bf16.mxu0 %v2066
    %2518 = vmatpush1.bf16.msra.mxu0 %v2065
    %2519 = vmatprep.subr.bf16.mxu0 %v2072
    %2520 = vmatpush1.bf16.msra.mxu0 %v2071
    %2521 = vmatprep.subr.bf16.mxu0 %v2078
    %2522 = vmatpush1.bf16.msra.mxu0 %v2077
    %2523 = vmatprep.subr.bf16.mxu0 %v2084
    %2524 = vmatpush1.bf16.msra.mxu0 %v2083
    %2525 = vmatprep.subr.bf16.mxu0 %v2090
    %2526 = vmatpush1.bf16.msra.mxu0 %v2089
    %2527 = vmatprep.subr.bf16.mxu0 %v2096
    %2528 = vmatpush1.bf16.msra.mxu0 %v2095
    %2529 = vmatprep.subr.bf16.mxu0 %v2102
    %2530 = vmatpush1.bf16.msra.mxu0 %v2101
    %2531 = vmatprep.subr.bf16.mxu0 %v2108
    %2532 = vmatpush1.bf16.msra.mxu0 %v2107
    %2533 = vmatprep.subr.bf16.mxu0 %v2114
    %2534 = vmatpush1.bf16.msra.mxu0 %v2113
    %2535 = vmatprep.subr.bf16.mxu0 %v2120
    %2536 = vmatpush1.bf16.msra.mxu0 %v2119
    %2537 = vmatprep.subr.bf16.mxu0 %v2126
    %2538 = vmatpush1.bf16.msra.mxu0 %v2125
    %2539 = vmatprep.subr.bf16.mxu0 %v2132
    %2540 = vmatpush1.bf16.msra.mxu0 %v2131
    %2541 = vmatprep.mubr.bf16.mxu0 %v1456
    %2542 = vmatmul.mubr.bf16.gmra.mrb[0].mxu0 %v1455
    %v2543 = vpop.f32.mrb[0].mxu0
    %v2544 = vadd.f32 0.0, %v2543
    %v2545 = vpop.f32.mrb[0].mxu0
    %v2546 = vadd.f32 0.0, %v2545
    %v2547 = vpop.f32.mrb[0].mxu0
    %v2548 = vadd.f32 0.0, %v2547
    %v2549 = vpop.f32.mrb[0].mxu0
    %v2550 = vadd.f32 0.0, %v2549
    %2551 = vdwg.mxu0
    %2552 = vmatprep.subr.bf16.mxu0 %v2138
    %2553 = vmatpush1.bf16.msra.mxu0 %v2137
    %2554 = vmatprep.subr.bf16.mxu0 %v2144
    %2555 = vmatpush1.bf16.msra.mxu0 %v2143
    %2556 = vmatprep.subr.bf16.mxu0 %v2150
    %2557 = vmatpush1.bf16.msra.mxu0 %v2149
    %2558 = vmatprep.subr.bf16.mxu0 %v2156
    %2559 = vmatpush1.bf16.msra.mxu0 %v2155
    %2560 = vmatprep.subr.bf16.mxu0 %v2162
    %2561 = vmatpush1.bf16.msra.mxu0 %v2161
    %2562 = vmatprep.subr.bf16.mxu0 %v2168
    %2563 = vmatpush1.bf16.msra.mxu0 %v2167
    %2564 = vmatprep.subr.bf16.mxu0 %v2174
    %2565 = vmatpush1.bf16.msra.mxu0 %v2173
    %2566 = vmatprep.subr.bf16.mxu0 %v2180
    %2567 = vmatpush1.bf16.msra.mxu0 %v2179
    %2568 = vmatprep.subr.bf16.mxu0 %v2186
    %2569 = vmatpush1.bf16.msra.mxu0 %v2185
    %2570 = vmatprep.subr.bf16.mxu0 %v2192
    %2571 = vmatpush1.bf16.msra.mxu0 %v2191
    %2572 = vmatprep.subr.bf16.mxu0 %v2198
    %2573 = vmatpush1.bf16.msra.mxu0 %v2197
    %2574 = vmatprep.subr.bf16.mxu0 %v2204
    %2575 = vmatpush1.bf16.msra.mxu0 %v2203
    %2576 = vmatprep.subr.bf16.mxu0 %v2210
    %2577 = vmatpush1.bf16.msra.mxu0 %v2209
    %2578 = vmatprep.subr.bf16.mxu0 %v2216
    %2579 = vmatpush1.bf16.msra.mxu0 %v2215
    %2580 = vmatprep.subr.bf16.mxu0 %v2222
    %2581 = vmatpush1.bf16.msra.mxu0 %v2221
    %2582 = vmatprep.subr.bf16.mxu0 %v2228
    %2583 = vmatpush1.bf16.msra.mxu0 %v2227
    %2584 = vmatprep.mubr.bf16.mxu0 %v1458
    %2585 = vmatmul.mubr.bf16.gmra.mrb[0].mxu0 %v1457
    %v2586 = vpop.f32.mrb[0].mxu0
    %v2587 = vadd.f32 %v2544, %v2586
    %v2588 = vpop.f32.mrb[0].mxu0
    %v2589 = vadd.f32 %v2546, %v2588
    %v2590 = vpop.f32.mrb[0].mxu0
    %v2591 = vadd.f32 %v2548, %v2590
    %v2592 = vpop.f32.mrb[0].mxu0
    %v2593 = vadd.f32 %v2550, %v2592
    %2594 = vdwg.mxu0
    %2595 = vmatprep.subr.bf16.mxu0 %v2044
    %2596 = vmatpush1.bf16.msra.mxu0 %v2043
    %2597 = vmatprep.subr.bf16.mxu0 %v2050
    %2598 = vmatpush1.bf16.msra.mxu0 %v2049
    %2599 = vmatprep.subr.bf16.mxu0 %v2056
    %2600 = vmatpush1.bf16.msra.mxu0 %v2055
    %2601 = vmatprep.subr.bf16.mxu0 %v2062
    %2602 = vmatpush1.bf16.msra.mxu0 %v2061
    %2603 = vmatprep.subr.bf16.mxu0 %v2068
    %2604 = vmatpush1.bf16.msra.mxu0 %v2067
    %2605 = vmatprep.subr.bf16.mxu0 %v2074
    %2606 = vmatpush1.bf16.msra.mxu0 %v2073
    %2607 = vmatprep.subr.bf16.mxu0 %v2080
    %2608 = vmatpush1.bf16.msra.mxu0 %v2079
    %2609 = vmatprep.subr.bf16.mxu0 %v2086
    %2610 = vmatpush1.bf16.msra.mxu0 %v2085
    %2611 = vmatprep.subr.bf16.mxu0 %v2092
    %2612 = vmatpush1.bf16.msra.mxu0 %v2091
    %2613 = vmatprep.subr.bf16.mxu0 %v2098
    %2614 = vmatpush1.bf16.msra.mxu0 %v2097
    %2615 = vmatprep.subr.bf16.mxu0 %v2104
    %2616 = vmatpush1.bf16.msra.mxu0 %v2103
    %2617 = vmatprep.subr.bf16.mxu0 %v2110
    %2618 = vmatpush1.bf16.msra.mxu0 %v2109
    %2619 = vmatprep.subr.bf16.mxu0 %v2116
    %2620 = vmatpush1.bf16.msra.mxu0 %v2115
    %2621 = vmatprep.subr.bf16.mxu0 %v2122
    %2622 = vmatpush1.bf16.msra.mxu0 %v2121
    %2623 = vmatprep.subr.bf16.mxu0 %v2128
    %2624 = vmatpush1.bf16.msra.mxu0 %v2127
    %2625 = vmatprep.subr.bf16.mxu0 %v2134
    %2626 = vmatpush1.bf16.msra.mxu0 %v2133
    %2627 = vmatprep.mubr.bf16.mxu0 %v1456
    %2628 = vmatmul.mubr.bf16.gmra.mrb[0].mxu0 %v1455
    %v2629 = vpop.f32.mrb[0].mxu0
    %v2630 = vadd.f32 0.0, %v2629
    %v2631 = vpop.f32.mrb[0].mxu0
    %v2632 = vadd.f32 0.0, %v2631
    %v2633 = vpop.f32.mrb[0].mxu0
    %v2634 = vadd.f32 0.0, %v2633
    %v2635 = vpop.f32.mrb[0].mxu0
    %v2636 = vadd.f32 0.0, %v2635
    %2637 = vdwg.mxu0
    %2638 = vmatprep.subr.bf16.mxu0 %v2140
    %2639 = vmatpush1.bf16.msra.mxu0 %v2139
    %2640 = vmatprep.subr.bf16.mxu0 %v2146
    %2641 = vmatpush1.bf16.msra.mxu0 %v2145
    %2642 = vmatprep.subr.bf16.mxu0 %v2152
    %2643 = vmatpush1.bf16.msra.mxu0 %v2151
    %2644 = vmatprep.subr.bf16.mxu0 %v2158
    %2645 = vmatpush1.bf16.msra.mxu0 %v2157
    %2646 = vmatprep.subr.bf16.mxu0 %v2164
    %2647 = vmatpush1.bf16.msra.mxu0 %v2163
    %2648 = vmatprep.subr.bf16.mxu0 %v2170
    %2649 = vmatpush1.bf16.msra.mxu0 %v2169
    %2650 = vmatprep.subr.bf16.mxu0 %v2176
    %2651 = vmatpush1.bf16.msra.mxu0 %v2175
    %2652 = vmatprep.subr.bf16.mxu0 %v2182
    %2653 = vmatpush1.bf16.msra.mxu0 %v2181
    %2654 = vmatprep.subr.bf16.mxu0 %v2188
    %2655 = vmatpush1.bf16.msra.mxu0 %v2187
    %2656 = vmatprep.subr.bf16.mxu0 %v2194
    %2657 = vmatpush1.bf16.msra.mxu0 %v2193
    %2658 = vmatprep.subr.bf16.mxu0 %v2200
    %2659 = vmatpush1.bf16.msra.mxu0 %v2199
    %2660 = vmatprep.subr.bf16.mxu0 %v2206
    %2661 = vmatpush1.bf16.msra.mxu0 %v2205
    %2662 = vmatprep.subr.bf16.mxu0 %v2212
    %2663 = vmatpush1.bf16.msra.mxu0 %v2211
    %2664 = vmatprep.subr.bf16.mxu0 %v2218
    %2665 = vmatpush1.bf16.msra.mxu0 %v2217
    %2666 = vmatprep.subr.bf16.mxu0 %v2224
    %2667 = vmatpush1.bf16.msra.mxu0 %v2223
    %2668 = vmatprep.subr.bf16.mxu0 %v2230
    %2669 = vmatpush1.bf16.msra.mxu0 %v2229
    %2670 = vmatprep.mubr.bf16.mxu0 %v1458
    %2671 = vmatmul.mubr.bf16.gmra.mrb[0].mxu0 %v1457
    %v2672 = vpop.f32.mrb[0].mxu0
    %v2673 = vadd.f32 %v2630, %v2672
    %v2674 = vpop.f32.mrb[0].mxu0
    %v2675 = vadd.f32 %v2632, %v2674
    %v2676 = vpop.f32.mrb[0].mxu0
    %v2677 = vadd.f32 %v2634, %v2676
    %v2678 = vpop.f32.mrb[0].mxu0
    %v2679 = vadd.f32 %v2636, %v2678
    %2680 = vdwg.mxu0
    %v2681 = vmul.f32 %v2501, 0.14285715
    %v2682 = vmul.f32 %v2503, 0.14285715
    %v2683 = vmul.f32 %v2587, 0.14285715
    %v2684 = vmul.f32 %v2589, 0.14285715
    %v2685 = vmul.f32 %v2673, 0.14285715
    %v2686 = vmul.f32 %v2675, 0.14285715
    %v2687 = vmul.f32 %v2505, 0.14285715
    %v2688 = vmul.f32 %v2507, 0.14285715
    %v2689 = vmul.f32 %v2591, 0.14285715
    %v2690 = vmul.f32 %v2593, 0.14285715
    %v2691 = vmul.f32 %v2677, 0.14285715
    %v2692 = vmul.f32 %v2679, 0.14285715
    %v2693 = vpack.c.bf16 %v2687, %v2681
    %v2694 = vpack.c.bf16 %v2688, %v2682
    %v2695 = vpack.c.bf16 %v2689, %v2683
    %v2696 = vpack.c.bf16 %v2690, %v2684
    %v2697 = vpack.c.bf16 %v2691, %v2685
    %v2698 = vpack.c.bf16 %v2692, %v2686
    %v2705 = vunpack.c.l.b16 %v2693
    %v2706 = vunpack.c.l.b16 %v2694
    %v2707 = vunpack.c.l.b16 %v2695
    %v2708 = vunpack.c.l.b16 %v2696
    %v2709 = vunpack.c.l.b16 %v2697
    %v2710 = vunpack.c.l.b16 %v2698
    %v2711 = vunpack.c.h.b16 %v2693
    %v2712 = vunpack.c.h.b16 %v2694
    %v2713 = vunpack.c.h.b16 %v2695
    %v2714 = vunpack.c.h.b16 %v2696
    %v2715 = vunpack.c.h.b16 %v2697
    %v2716 = vunpack.c.h.b16 %v2698
    %v2717 = vpack.c.b16 %v2706, %v2705
    %v2718 = vpack.c.b16 %v2708, %v2707
    %v2719 = vpack.c.b16 %v2710, %v2709
    %v2720 = vpack.c.b16 %v2712, %v2711
    %v2721 = vpack.c.b16 %v2714, %v2713
    %v2722 = vpack.c.b16 %v2716, %v2715
    %2729 = vst [vmem:[#allocation5] sm:$0xff] %v2717
    %2730 = vst [vmem:[#allocation5 + $0x8] sm:$0xff] %v2718
    %2731 = vst [vmem:[#allocation5 + $0x10] sm:$0xff] %v2719
    %2732 = vst [vmem:[#allocation5 + $0x18] sm:$0xff] %v2720
    %2733 = vst [vmem:[#allocation5 + $0x20] sm:$0xff] %v2721
    %2734 = vst [vmem:[#allocation5 + $0x28] sm:$0xff] %v2722
    // Predicated region
    $region14: #{tpu_custom_call.1} parent=1 // pred_check
      _
    $region15: #{tpu_custom_call.1} parent=1 // pred_check_branch
      %2736 = sbr.rel (0) target = $region17
    $region16: #{tpu_custom_call.1} parent=1 // pred_region
      %s2738 = ssub.s32 768, 768
      %2739 = vsyncadd [#allocation4], %s2738
      %s2740 = sshll.u32 [#allocation5], 4
      %s2741 = int_to_ptr.vmem [resolvable:$true] %s2740
      %2746 = dma.vmem_to_hbm [thread:$0]  %s2741, 768, %s2, [#allocation4], 384, 384, 24
    $region17: #{tpu_custom_call.1} parent=1 // pred_fallthru
      _
    // Predicated region
    $region18: #{tpu_custom_call.1} parent=1 // pred_check
      _
    $region19: #{tpu_custom_call.1} parent=1 // pred_check_branch
      %2748 = sbr.rel (0) target = $region21
    $region20: #{tpu_custom_call.1} parent=1 // pred_region
      %2749 = dma.done [#allocation4], 768
    $region21: #{tpu_custom_call.1} parent=1 // pred_fallthru
      _
    %2750 = vsyncpa [#allocation3], 1
    %2751 = vsyncpa [#allocation4], 1

</llo_original>
